<compile_context>
chip_gen: v6e
topology: v6e:2x2x1
jax: 0.10.0
libtpu: 0.0.40
codegen_flags: <defaults>
</compile_context>

<pallas_src>
import functools

import jax
import jax.numpy as jnp
from jax.experimental import pallas as pl
from jax.experimental.pallas import tpu as pltpu


def _attention_kernel(x_ref, wq_ref, wk_ref, wv_ref, wp_ref, b_ref, o_ref,
                      *, num_heads, head_dim, bt, n_tokens):
    # x_ref:  (Bt, C, N)  f32   -- NCHW-flattened block (channel-major)
    # wq/wk/wv_ref: (nh, C, hd) bf16   (scale already folded into wq)
    # wp_ref: (nh, hd, C) bf16
    # b_ref:  (1, C)      f32
    # o_ref:  (Bt, C, N)  f32
    C = num_heads * head_dim
    N = n_tokens
    M = bt * N

    # channel-major (C, N) -> token-major (N, C) per batch element (on-chip,
    # XLU), stacked into one (Bt*N, C) slab so every projection matmul sees a
    # full M dimension.
    rows = [x_ref[b].T for b in range(bt)]                       # each (N, C)
    x2 = rows[0] if bt == 1 else jnp.concatenate(rows, axis=0)   # (M, C) f32
    x2_bf = x2.astype(jnp.bfloat16)

    acc = jnp.zeros((M, C), dtype=jnp.float32)                   # proj accumulator

    for h in range(num_heads):
        wq_h = wq_ref[h]            # (C, hd) bf16 -- leading-axis slice (aligned)
        wk_h = wk_ref[h]
        wv_h = wv_ref[h]
        wp_h = wp_ref[h]            # (hd, C) bf16

        # q/k/v projections on the MXU (bf16 in, f32 accumulate)
        q = jnp.dot(x2_bf, wq_h, preferred_element_type=jnp.float32)   # (M, hd)
        k = jnp.dot(x2_bf, wk_h, preferred_element_type=jnp.float32)
        v = jnp.dot(x2_bf, wv_h, preferred_element_type=jnp.float32)

        q3 = q.reshape(bt, N, head_dim).astype(jnp.bfloat16)
        k3 = k.reshape(bt, N, head_dim).astype(jnp.bfloat16)
        v3 = v.reshape(bt, N, head_dim).astype(jnp.bfloat16)

        # scaled scores (scale folded into wq); softmax in f32
        s = jnp.einsum('bqd,bkd->bqk', q3, k3,
                       preferred_element_type=jnp.float32)             # (Bt,N,N)
        s = s - jnp.max(s, axis=-1, keepdims=True)
        p = jnp.exp(s)
        p = p * pl.reciprocal(jnp.sum(p, axis=-1, keepdims=True), approx=True)
        # attn_drop rate 0.0 -> identity

        o_h = jnp.einsum('bqk,bkd->bqd', p.astype(jnp.bfloat16), v3,
                         preferred_element_type=jnp.float32)           # (Bt,N,hd)

        # accumulate this head's contribution through the output projection
        # (replaces concat + full proj; bounds live ranges per head).
        acc = acc + jnp.dot(o_h.reshape(M, head_dim).astype(jnp.bfloat16),
                            wp_h, preferred_element_type=jnp.float32)  # (M, C)

    out = acc + b_ref[0][None, :]        # proj bias; proj_drop 0.0 -> identity

    # token-major -> channel-major, emit NCHW-compatible (C, N) blocks
    for b in range(bt):
        o_ref[b] = out[b * N:(b + 1) * N, :].T.astype(o_ref.dtype)


def attention_forward(x_nchw, w_qkv, w_proj, b_proj, *, head_dim=32,
                      max_batch_block=8):
    """x_nchw: [B, C, H, W] float32. Weights use the x @ W convention:
       w_qkv: [C, 3C] (columns ordered [q|k|v], each [head][head_dim]),
       w_proj: [C, C], b_proj: [C]."""
    B, C, H, W = x_nchw.shape
    N = H * W
    assert C % head_dim == 0, 'dim should be divisible by head_dim'
    assert N % 8 == 0, 'H*W must be a multiple of 8 (sublane tile)'
    nh = C // head_dim
    scale = head_dim ** (-0.5)

    # NCHW -> [B, C, N]: pure reshape, no HBM transpose pass. The layout change
    # to token-major happens inside the kernel.
    x = x_nchw.reshape(B, C, N)

    # Head-structured weights (tiny one-time transforms outside the kernel).
    # Fold the attention scale into Wq (exact: qkv_bias=False).
    wq = jnp.transpose(w_qkv[:, 0 * C:1 * C].reshape(C, nh, head_dim),
                       (1, 0, 2)) * scale                         # (nh, C, hd)
    wk = jnp.transpose(w_qkv[:, 1 * C:2 * C].reshape(C, nh, head_dim), (1, 0, 2))
    wv = jnp.transpose(w_qkv[:, 2 * C:3 * C].reshape(C, nh, head_dim), (1, 0, 2))
    wp = w_proj.reshape(nh, head_dim, C)                          # (nh, hd, C)

    # bf16 MXU operands (halves weight DMA bytes too); bias stays f32.
    wq = wq.astype(jnp.bfloat16)
    wk = wk.astype(jnp.bfloat16)
    wv = wv.astype(jnp.bfloat16)
    wp = wp.astype(jnp.bfloat16)
    b2 = b_proj.reshape(1, C).astype(jnp.float32)

    # Batch elements per grid step: largest divisor of B up to max_batch_block.
    bt = 1
    for cand in range(min(B, max_batch_block), 0, -1):
        if B % cand == 0:
            bt = cand
            break

    kernel = functools.partial(_attention_kernel, num_heads=nh,
                               head_dim=head_dim, bt=bt, n_tokens=N)

    out = pl.pallas_call(
        kernel,
        out_shape=jax.ShapeDtypeStruct((B, C, N), x_nchw.dtype),
        grid_spec=pltpu.PrefetchScalarGridSpec(
            num_scalar_prefetch=0,
            grid=(B // bt,),
            in_specs=[
                pl.BlockSpec((bt, C, N), lambda b: (b, 0, 0)),
                pl.BlockSpec((nh, C, head_dim), lambda b: (0, 0, 0)),
                pl.BlockSpec((nh, C, head_dim), lambda b: (0, 0, 0)),
                pl.BlockSpec((nh, C, head_dim), lambda b: (0, 0, 0)),
                pl.BlockSpec((nh, head_dim, C), lambda b: (0, 0, 0)),
                pl.BlockSpec((1, C), lambda b: (0, 0)),
            ],
            out_specs=pl.BlockSpec((bt, C, N), lambda b: (b, 0, 0)),
        ),
        compiler_params=pltpu.CompilerParams(
            dimension_semantics=("parallel",)),
    )(x, wq, wk, wv, wp, b2)

    # [B, C, N] -> [B, C, H, W]: pure reshape.
    return out.reshape(B, C, H, W)


def _reference_forward(x_nchw, w_qkv, w_proj, b_proj, *, head_dim=32):
    # pure-JAX (f32) reference mirroring the PyTorch forward
    B, C, H, W = x_nchw.shape
    N = H * W
    nh = C // head_dim
    scale = head_dim ** (-0.5)
    x = jnp.transpose(x_nchw.reshape(B, C, N), (0, 2, 1))          # (B, N, C)
    qkv = x @ w_qkv                                                # (B, N, 3C)
    qkv = qkv.reshape(B, N, 3, nh, head_dim).transpose(2, 0, 3, 1, 4)
    q, k, v = qkv[0], qkv[1], qkv[2]                               # (B, nh, N, hd)
    attn = (q * scale) @ jnp.swapaxes(k, -2, -1)                   # (B, nh, N, N)
    attn = jax.nn.softmax(attn, axis=-1)
    o = (attn @ v).transpose(0, 2, 1, 3).reshape(B, N, C)          # (B, N, C)
    o = o @ w_proj + b_proj
    return jnp.transpose(o, (0, 2, 1)).reshape(B, C, H, W)


if __name__ == "__main__":
    # Small shapes consistent with the module: head_dim=32, dim (C)=64 -> 2 heads.
    B, C, H, W = 2, 64, 8, 8
    head_dim = 32

    key = jax.random.PRNGKey(0)
    kx, kq, kp, kb = jax.random.split(key, 4)
    x = jax.random.normal(kx, (B, C, H, W), dtype=jnp.float32)
    # Deterministic synthetic parameters (x @ W convention):
    w_qkv = jax.random.normal(kq, (C, 3 * C), dtype=jnp.float32) * 0.05
    w_proj = jax.random.normal(kp, (C, C), dtype=jnp.float32) * 0.05
    b_proj = jax.random.normal(kb, (C,), dtype=jnp.float32) * 0.05

    fwd = jax.jit(functools.partial(attention_forward, head_dim=head_dim))
    out = fwd(x, w_qkv, w_proj, b_proj)
    out = jax.block_until_ready(out)

    ref = _reference_forward(x, w_qkv, w_proj, b_proj, head_dim=head_dim)
    assert out.shape == (B, C, H, W)
    # bf16 MXU operands (f32 accumulation) vs. full-f32 reference.
    assert jnp.allclose(out, ref, atol=2e-2, rtol=2e-2)

    print("KERNEL_OK")
</pallas_src>

<mosaic_0001>
module attributes {stable_mosaic.version = 11 : i64} {
  func.func @_attention_kernel(%arg0: i32, %arg1: memref<2x64x64xf32, #tpu.memory_space<vmem>>, %arg2: memref<2x64x32xbf16, #tpu.memory_space<vmem>>, %arg3: memref<2x64x32xbf16, #tpu.memory_space<vmem>>, %arg4: memref<2x64x32xbf16, #tpu.memory_space<vmem>>, %arg5: memref<2x32x64xbf16, #tpu.memory_space<vmem>>, %arg6: memref<1x64xf32, #tpu.memory_space<vmem>>, %arg7: memref<2x64x64xf32, #tpu.memory_space<vmem>>) attributes {dimension_semantics = [#tpu.dimension_semantics<parallel>], iteration_bounds = array<i64: 1>, scalar_prefetch = 0 : i64, scratch_operands = 0 : i64, tpu.core_type = #tpu.core_type<tc>, window_params = [{transform_indices = @transform_0, window_bounds = array<i64: 2, 64, 64>}, {pipeline_mode = #tpu.pipeline_mode<synchronous>, transform_indices = @transform_1, window_bounds = array<i64: 2, 64, 32>}, {pipeline_mode = #tpu.pipeline_mode<synchronous>, transform_indices = @transform_2, window_bounds = array<i64: 2, 64, 32>}, {pipeline_mode = #tpu.pipeline_mode<synchronous>, transform_indices = @transform_3, window_bounds = array<i64: 2, 64, 32>}, {pipeline_mode = #tpu.pipeline_mode<synchronous>, transform_indices = @transform_4, window_bounds = array<i64: 2, 32, 64>}, {pipeline_mode = #tpu.pipeline_mode<synchronous>, transform_indices = @transform_5, window_bounds = array<i64: 1, 64>}, {transform_indices = @transform_6, window_bounds = array<i64: 2, 64, 64>}]} {
    %c0 = arith.constant 0 : index
    %c0_0 = arith.constant 0 : index
    %c0_1 = arith.constant 0 : index
    %0 = vector.load %arg1[%c0, %c0_0, %c0_1] : memref<2x64x64xf32, #tpu.memory_space<vmem>>, vector<1x64x64xf32>
    %1 = vector.shape_cast %0 : vector<1x64x64xf32> to vector<64x64xf32>
    %2 = tpu.transpose %1, [1, 0] : vector<64x64xf32> -> vector<64x64xf32>
    %c1 = arith.constant 1 : index
    %c0_2 = arith.constant 0 : index
    %c0_3 = arith.constant 0 : index
    %3 = vector.load %arg1[%c1, %c0_2, %c0_3] : memref<2x64x64xf32, #tpu.memory_space<vmem>>, vector<1x64x64xf32>
    %4 = vector.shape_cast %3 : vector<1x64x64xf32> to vector<64x64xf32>
    %5 = tpu.transpose %4, [1, 0] : vector<64x64xf32> -> vector<64x64xf32>
    %6 = tpu.concatenate %2, %5 in 0 : vector<64x64xf32>, vector<64x64xf32> -> vector<128x64xf32>
    %7 = arith.truncf %6 : vector<128x64xf32> to vector<128x64xbf16>
    %cst = arith.constant 0.000000e+00 : f32
    %8 = vector.broadcast %cst : f32 to vector<128x64xf32>
    %c0_4 = arith.constant 0 : index
    %c0_5 = arith.constant 0 : index
    %c0_6 = arith.constant 0 : index
    %9 = vector.load %arg2[%c0_4, %c0_5, %c0_6] : memref<2x64x32xbf16, #tpu.memory_space<vmem>>, vector<1x64x32xbf16>
    %10 = vector.shape_cast %9 : vector<1x64x32xbf16> to vector<64x32xbf16>
    %c0_7 = arith.constant 0 : index
    %c0_8 = arith.constant 0 : index
    %c0_9 = arith.constant 0 : index
    %11 = vector.load %arg3[%c0_7, %c0_8, %c0_9] : memref<2x64x32xbf16, #tpu.memory_space<vmem>>, vector<1x64x32xbf16>
    %12 = vector.shape_cast %11 : vector<1x64x32xbf16> to vector<64x32xbf16>
    %c0_10 = arith.constant 0 : index
    %c0_11 = arith.constant 0 : index
    %c0_12 = arith.constant 0 : index
    %13 = vector.load %arg4[%c0_10, %c0_11, %c0_12] : memref<2x64x32xbf16, #tpu.memory_space<vmem>>, vector<1x64x32xbf16>
    %14 = vector.shape_cast %13 : vector<1x64x32xbf16> to vector<64x32xbf16>
    %c0_13 = arith.constant 0 : index
    %c0_14 = arith.constant 0 : index
    %c0_15 = arith.constant 0 : index
    %15 = vector.load %arg5[%c0_13, %c0_14, %c0_15] : memref<2x32x64xbf16, #tpu.memory_space<vmem>>, vector<1x32x64xbf16>
    %16 = vector.shape_cast %15 : vector<1x32x64xbf16> to vector<32x64xbf16>
    %cst_16 = arith.constant dense<0.000000e+00> : vector<128x32xf32>
    %17 = tpu.matmul %7, %10, %cst_16 {dimension_numbers = #tpu.dot_dimension_numbers<[1], [0], [0], [1], [0, 0, 1, 1], [], []>} : vector<128x64xbf16>, vector<64x32xbf16>, vector<128x32xf32> -> vector<128x32xf32>
    %cst_17 = arith.constant dense<0.000000e+00> : vector<128x32xf32>
    %18 = tpu.matmul %7, %12, %cst_17 {dimension_numbers = #tpu.dot_dimension_numbers<[1], [0], [0], [1], [0, 0, 1, 1], [], []>} : vector<128x64xbf16>, vector<64x32xbf16>, vector<128x32xf32> -> vector<128x32xf32>
    %cst_18 = arith.constant dense<0.000000e+00> : vector<128x32xf32>
    %19 = tpu.matmul %7, %14, %cst_18 {dimension_numbers = #tpu.dot_dimension_numbers<[1], [0], [0], [1], [0, 0, 1, 1], [], []>} : vector<128x64xbf16>, vector<64x32xbf16>, vector<128x32xf32> -> vector<128x32xf32>
    %20 = vector.shape_cast %17 : vector<128x32xf32> to vector<2x64x32xf32>
    %21 = arith.truncf %20 : vector<2x64x32xf32> to vector<2x64x32xbf16>
    %22 = vector.shape_cast %18 : vector<128x32xf32> to vector<2x64x32xf32>
    %23 = arith.truncf %22 : vector<2x64x32xf32> to vector<2x64x32xbf16>
    %24 = vector.shape_cast %19 : vector<128x32xf32> to vector<2x64x32xf32>
    %25 = arith.truncf %24 : vector<2x64x32xf32> to vector<2x64x32xbf16>
    "tpu.trace_start"() <{level = 10 : i32, message = "bqd,bkd->bqk"}> : () -> ()
    %cst_19 = arith.constant dense<0.000000e+00> : vector<2x64x64xf32>
    %26 = tpu.matmul %21, %23, %cst_19 {dimension_numbers = #tpu.dot_dimension_numbers<[2], [2], [1], [1], [0, 0, 0, 1, 1, 1], [0], [0]>} : vector<2x64x32xbf16>, vector<2x64x32xbf16>, vector<2x64x64xf32> -> vector<2x64x64xf32>
    "tpu.trace_stop"() : () -> ()
    %cst_20 = arith.constant dense<0xFF800000> : vector<2x64xf32>
    %27 = vector.multi_reduction <maximumf>, %26, %cst_20 [2] : vector<2x64x64xf32> to vector<2x64xf32>
    %28 = vector.shape_cast %27 : vector<2x64xf32> to vector<2x64x1xf32>
    %29 = vector.broadcast %28 : vector<2x64x1xf32> to vector<2x64x64xf32>
    %30 = arith.subf %26, %29 : vector<2x64x64xf32>
    %31 = math.exp %30 : vector<2x64x64xf32>
    %cst_21 = arith.constant dense<0.000000e+00> : vector<2x64xf32>
    %32 = vector.multi_reduction <add>, %31, %cst_21 [2] : vector<2x64x64xf32> to vector<2x64xf32>
    %33 = vector.shape_cast %32 : vector<2x64xf32> to vector<2x64x1xf32>
    %34 = tpu.reciprocal %33 {approx = true} : vector<2x64x1xf32> -> vector<2x64x1xf32>
    %35 = vector.broadcast %34 : vector<2x64x1xf32> to vector<2x64x64xf32>
    %36 = arith.mulf %31, %35 : vector<2x64x64xf32>
    %37 = arith.truncf %36 : vector<2x64x64xf32> to vector<2x64x64xbf16>
    "tpu.trace_start"() <{level = 10 : i32, message = "bqk,bkd->bqd"}> : () -> ()
    %cst_22 = arith.constant dense<0.000000e+00> : vector<2x64x32xf32>
    %38 = tpu.matmul %37, %25, %cst_22 {dimension_numbers = #tpu.dot_dimension_numbers<[2], [1], [1], [2], [0, 0, 0, 1, 1, 2], [0], [0]>} : vector<2x64x64xbf16>, vector<2x64x32xbf16>, vector<2x64x32xf32> -> vector<2x64x32xf32>
    "tpu.trace_stop"() : () -> ()
    %39 = vector.shape_cast %38 : vector<2x64x32xf32> to vector<128x32xf32>
    %40 = arith.truncf %39 : vector<128x32xf32> to vector<128x32xbf16>
    %cst_23 = arith.constant dense<0.000000e+00> : vector<128x64xf32>
    %41 = tpu.matmul %40, %16, %cst_23 {dimension_numbers = #tpu.dot_dimension_numbers<[1], [0], [0], [1], [0, 0, 1, 1], [], []>} : vector<128x32xbf16>, vector<32x64xbf16>, vector<128x64xf32> -> vector<128x64xf32>
    %42 = arith.addf %8, %41 : vector<128x64xf32>
    %c1_24 = arith.constant 1 : index
    %c0_25 = arith.constant 0 : index
    %c0_26 = arith.constant 0 : index
    %43 = vector.load %arg2[%c1_24, %c0_25, %c0_26] : memref<2x64x32xbf16, #tpu.memory_space<vmem>>, vector<1x64x32xbf16>
    %44 = vector.shape_cast %43 : vector<1x64x32xbf16> to vector<64x32xbf16>
    %c1_27 = arith.constant 1 : index
    %c0_28 = arith.constant 0 : index
    %c0_29 = arith.constant 0 : index
    %45 = vector.load %arg3[%c1_27, %c0_28, %c0_29] : memref<2x64x32xbf16, #tpu.memory_space<vmem>>, vector<1x64x32xbf16>
    %46 = vector.shape_cast %45 : vector<1x64x32xbf16> to vector<64x32xbf16>
    %c1_30 = arith.constant 1 : index
    %c0_31 = arith.constant 0 : index
    %c0_32 = arith.constant 0 : index
    %47 = vector.load %arg4[%c1_30, %c0_31, %c0_32] : memref<2x64x32xbf16, #tpu.memory_space<vmem>>, vector<1x64x32xbf16>
    %48 = vector.shape_cast %47 : vector<1x64x32xbf16> to vector<64x32xbf16>
    %c1_33 = arith.constant 1 : index
    %c0_34 = arith.constant 0 : index
    %c0_35 = arith.constant 0 : index
    %49 = vector.load %arg5[%c1_33, %c0_34, %c0_35] : memref<2x32x64xbf16, #tpu.memory_space<vmem>>, vector<1x32x64xbf16>
    %50 = vector.shape_cast %49 : vector<1x32x64xbf16> to vector<32x64xbf16>
    %cst_36 = arith.constant dense<0.000000e+00> : vector<128x32xf32>
    %51 = tpu.matmul %7, %44, %cst_36 {dimension_numbers = #tpu.dot_dimension_numbers<[1], [0], [0], [1], [0, 0, 1, 1], [], []>} : vector<128x64xbf16>, vector<64x32xbf16>, vector<128x32xf32> -> vector<128x32xf32>
    %cst_37 = arith.constant dense<0.000000e+00> : vector<128x32xf32>
    %52 = tpu.matmul %7, %46, %cst_37 {dimension_numbers = #tpu.dot_dimension_numbers<[1], [0], [0], [1], [0, 0, 1, 1], [], []>} : vector<128x64xbf16>, vector<64x32xbf16>, vector<128x32xf32> -> vector<128x32xf32>
    %cst_38 = arith.constant dense<0.000000e+00> : vector<128x32xf32>
    %53 = tpu.matmul %7, %48, %cst_38 {dimension_numbers = #tpu.dot_dimension_numbers<[1], [0], [0], [1], [0, 0, 1, 1], [], []>} : vector<128x64xbf16>, vector<64x32xbf16>, vector<128x32xf32> -> vector<128x32xf32>
    %54 = vector.shape_cast %51 : vector<128x32xf32> to vector<2x64x32xf32>
    %55 = arith.truncf %54 : vector<2x64x32xf32> to vector<2x64x32xbf16>
    %56 = vector.shape_cast %52 : vector<128x32xf32> to vector<2x64x32xf32>
    %57 = arith.truncf %56 : vector<2x64x32xf32> to vector<2x64x32xbf16>
    %58 = vector.shape_cast %53 : vector<128x32xf32> to vector<2x64x32xf32>
    %59 = arith.truncf %58 : vector<2x64x32xf32> to vector<2x64x32xbf16>
    "tpu.trace_start"() <{level = 10 : i32, message = "bqd,bkd->bqk"}> : () -> ()
    %cst_39 = arith.constant dense<0.000000e+00> : vector<2x64x64xf32>
    %60 = tpu.matmul %55, %57, %cst_39 {dimension_numbers = #tpu.dot_dimension_numbers<[2], [2], [1], [1], [0, 0, 0, 1, 1, 1], [0], [0]>} : vector<2x64x32xbf16>, vector<2x64x32xbf16>, vector<2x64x64xf32> -> vector<2x64x64xf32>
    "tpu.trace_stop"() : () -> ()
    %cst_40 = arith.constant dense<0xFF800000> : vector<2x64xf32>
    %61 = vector.multi_reduction <maximumf>, %60, %cst_40 [2] : vector<2x64x64xf32> to vector<2x64xf32>
    %62 = vector.shape_cast %61 : vector<2x64xf32> to vector<2x64x1xf32>
    %63 = vector.broadcast %62 : vector<2x64x1xf32> to vector<2x64x64xf32>
    %64 = arith.subf %60, %63 : vector<2x64x64xf32>
    %65 = math.exp %64 : vector<2x64x64xf32>
    %cst_41 = arith.constant dense<0.000000e+00> : vector<2x64xf32>
    %66 = vector.multi_reduction <add>, %65, %cst_41 [2] : vector<2x64x64xf32> to vector<2x64xf32>
    %67 = vector.shape_cast %66 : vector<2x64xf32> to vector<2x64x1xf32>
    %68 = tpu.reciprocal %67 {approx = true} : vector<2x64x1xf32> -> vector<2x64x1xf32>
    %69 = vector.broadcast %68 : vector<2x64x1xf32> to vector<2x64x64xf32>
    %70 = arith.mulf %65, %69 : vector<2x64x64xf32>
    %71 = arith.truncf %70 : vector<2x64x64xf32> to vector<2x64x64xbf16>
    "tpu.trace_start"() <{level = 10 : i32, message = "bqk,bkd->bqd"}> : () -> ()
    %cst_42 = arith.constant dense<0.000000e+00> : vector<2x64x32xf32>
    %72 = tpu.matmul %71, %59, %cst_42 {dimension_numbers = #tpu.dot_dimension_numbers<[2], [1], [1], [2], [0, 0, 0, 1, 1, 2], [0], [0]>} : vector<2x64x64xbf16>, vector<2x64x32xbf16>, vector<2x64x32xf32> -> vector<2x64x32xf32>
    "tpu.trace_stop"() : () -> ()
    %73 = vector.shape_cast %72 : vector<2x64x32xf32> to vector<128x32xf32>
    %74 = arith.truncf %73 : vector<128x32xf32> to vector<128x32xbf16>
    %cst_43 = arith.constant dense<0.000000e+00> : vector<128x64xf32>
    %75 = tpu.matmul %74, %50, %cst_43 {dimension_numbers = #tpu.dot_dimension_numbers<[1], [0], [0], [1], [0, 0, 1, 1], [], []>} : vector<128x32xbf16>, vector<32x64xbf16>, vector<128x64xf32> -> vector<128x64xf32>
    %76 = arith.addf %42, %75 : vector<128x64xf32>
    %c0_44 = arith.constant 0 : index
    %c0_45 = arith.constant 0 : index
    %77 = vector.load %arg6[%c0_44, %c0_45] : memref<1x64xf32, #tpu.memory_space<vmem>>, vector<1x64xf32>
    %78 = vector.shape_cast %77 : vector<1x64xf32> to vector<64xf32>
    %79 = vector.shape_cast %78 : vector<64xf32> to vector<1x64xf32>
    %80 = vector.broadcast %79 : vector<1x64xf32> to vector<128x64xf32>
    %81 = arith.addf %76, %80 : vector<128x64xf32>
    %82 = vector.extract_strided_slice %81 {offsets = [0, 0], sizes = [64, 64], strides = [1, 1]} : vector<128x64xf32> to vector<64x64xf32>
    %83 = tpu.transpose %82, [1, 0] : vector<64x64xf32> -> vector<64x64xf32>
    %c0_46 = arith.constant 0 : index
    %c0_47 = arith.constant 0 : index
    %c0_48 = arith.constant 0 : index
    %84 = vector.load %arg7[%c0_46, %c0_47, %c0_48] : memref<2x64x64xf32, #tpu.memory_space<vmem>>, vector<1x64x64xf32>
    %85 = vector.shape_cast %84 : vector<1x64x64xf32> to vector<64x64xf32>
    %86 = vector.shape_cast %83 : vector<64x64xf32> to vector<1x64x64xf32>
    tpu.vector_store %arg7[%c0_46, %c0_47, %c0_48], %86 {strides = array<i32>} : memref<2x64x64xf32, #tpu.memory_space<vmem>>, vector<1x64x64xf32>,
    %87 = vector.extract_strided_slice %81 {offsets = [64, 0], sizes = [64, 64], strides = [1, 1]} : vector<128x64xf32> to vector<64x64xf32>
    %88 = tpu.transpose %87, [1, 0] : vector<64x64xf32> -> vector<64x64xf32>
    %c1_49 = arith.constant 1 : index
    %c0_50 = arith.constant 0 : index
    %c0_51 = arith.constant 0 : index
    %89 = vector.load %arg7[%c1_49, %c0_50, %c0_51] : memref<2x64x64xf32, #tpu.memory_space<vmem>>, vector<1x64x64xf32>
    %90 = vector.shape_cast %89 : vector<1x64x64xf32> to vector<64x64xf32>
    %91 = vector.shape_cast %88 : vector<64x64xf32> to vector<1x64x64xf32>
    tpu.vector_store %arg7[%c1_49, %c0_50, %c0_51], %91 {strides = array<i32>} : memref<2x64x64xf32, #tpu.memory_space<vmem>>, vector<1x64x64xf32>,
    return
  }
  func.func @transform_0(%arg0: i32) -> (i32, i32, i32) {
    %c0_i32 = arith.constant 0 : i32
    %c0_i32_0 = arith.constant 0 : i32
    %c0_i32_1 = arith.constant 0 : i32
    return %arg0, %c0_i32, %c0_i32_0 : i32, i32, i32
  }
  func.func @transform_1(%arg0: i32) -> (i32, i32, i32) {
    %c0_i32 = arith.constant 0 : i32
    %c0_i32_0 = arith.constant 0 : i32
    %c0_i32_1 = arith.constant 0 : i32
    %c0_i32_2 = arith.constant 0 : i32
    return %c0_i32, %c0_i32_0, %c0_i32_1 : i32, i32, i32
  }
  func.func @transform_2(%arg0: i32) -> (i32, i32, i32) {
    %c0_i32 = arith.constant 0 : i32
    %c0_i32_0 = arith.constant 0 : i32
    %c0_i32_1 = arith.constant 0 : i32
    %c0_i32_2 = arith.constant 0 : i32
    return %c0_i32, %c0_i32_0, %c0_i32_1 : i32, i32, i32
  }
  func.func @transform_3(%arg0: i32) -> (i32, i32, i32) {
    %c0_i32 = arith.constant 0 : i32
    %c0_i32_0 = arith.constant 0 : i32
    %c0_i32_1 = arith.constant 0 : i32
    %c0_i32_2 = arith.constant 0 : i32
    return %c0_i32, %c0_i32_0, %c0_i32_1 : i32, i32, i32
  }
  func.func @transform_4(%arg0: i32) -> (i32, i32, i32) {
    %c0_i32 = arith.constant 0 : i32
    %c0_i32_0 = arith.constant 0 : i32
    %c0_i32_1 = arith.constant 0 : i32
    %c0_i32_2 = arith.constant 0 : i32
    return %c0_i32, %c0_i32_0, %c0_i32_1 : i32, i32, i32
  }
  func.func @transform_5(%arg0: i32) -> (i32, i32) {
    %c0_i32 = arith.constant 0 : i32
    %c0_i32_0 = arith.constant 0 : i32
    %c0_i32_1 = arith.constant 0 : i32
    return %c0_i32, %c0_i32_0 : i32, i32
  }
  func.func @transform_6(%arg0: i32) -> (i32, i32, i32) {
    %c0_i32 = arith.constant 0 : i32
    %c0_i32_0 = arith.constant 0 : i32
    %c0_i32_1 = arith.constant 0 : i32
    return %arg0, %c0_i32, %c0_i32_0 : i32, i32, i32
  }
}

</mosaic_0001>

<llo_original>
// kernel: attention_forward.1
$region0: #{attention_forward.1}
  #allocation0 [shape = 'u32[]', space=smem, size = 0x4, offset = 0x4, fixed_abs, tag = 'smem constant byte address 0x4 - core index']
  #allocation1 [shape = 'u32[144,128]{1,0:T(1,128)}', space=vmem, size = 0x12000, scoped, tag = 'internal scratch']
  %s0 = inlined_call_operand.vmem [shape: f32[2,64,64], index: 0, kind: input, shape index: {}]
  %s1 = inlined_call_operand.vmem [shape: bf16[2,64,32], index: 1, kind: input, shape index: {}]
  %s2 = inlined_call_operand.vmem [shape: bf16[2,64,32], index: 2, kind: input, shape index: {}]
  %s3 = inlined_call_operand.vmem [shape: bf16[2,64,32], index: 3, kind: input, shape index: {}]
  %s4 = inlined_call_operand.vmem [shape: bf16[2,32,64], index: 4, kind: input, shape index: {}]
  %s5 = inlined_call_operand.vmem [shape: f32[1,64], index: 5, kind: input, shape index: {}]
  %s6 = inlined_call_operand.vmem [shape: f32[2,64,64], index: 6, kind: output, shape index: {}]
  %s7 = sld [smem:[#allocation0]]
  $region34: #{attention_forward.1} parent=0
    _
  %s9 = ssub.s32 1, %s7
  %s10 = scalar_select 0, %s9, %s7
  // Predicated region
  $region2: #{attention_forward.1} parent=0 // pred_check
    _
  $region3: #{attention_forward.1} parent=0 // pred_check_branch
    %12 = sbr.rel (0) target = $region5
  $region4: #{attention_forward.1} parent=0 // pred_region
    _
  $region5: #{attention_forward.1} parent=0 // pred_fallthru
    _
  // Predicated region
  $region6: #{attention_forward.1} parent=0 // pred_check
    _
  $region7: #{attention_forward.1} parent=0 // pred_check_branch
    %14 = sbr.rel (0) target = $region9
  $region8: #{attention_forward.1} parent=0 // pred_region
    _
  $region9: #{attention_forward.1} parent=0 // pred_fallthru
    _
  // Predicated region
  $region10: #{attention_forward.1} parent=0 // pred_check
    _
  $region11: #{attention_forward.1} parent=0 // pred_check_branch
    %16 = sbr.rel (0) target = $region13
  $region12: #{attention_forward.1} parent=0 // pred_region
    _
  $region13: #{attention_forward.1} parent=0 // pred_fallthru
    _
  // Predicated region
  $region14: #{attention_forward.1} parent=0 // pred_check
    _
  $region15: #{attention_forward.1} parent=0 // pred_check_branch
    %18 = sbr.rel (0) target = $region17
  $region16: #{attention_forward.1} parent=0 // pred_region
    _
  $region17: #{attention_forward.1} parent=0 // pred_fallthru
    _
  // Predicated region
  $region18: #{attention_forward.1} parent=0 // pred_check
    _
  $region19: #{attention_forward.1} parent=0 // pred_check_branch
    %20 = sbr.rel (0) target = $region21
  $region20: #{attention_forward.1} parent=0 // pred_region
    _
  $region21: #{attention_forward.1} parent=0 // pred_fallthru
    _
  // Predicated region
  $region22: #{attention_forward.1} parent=0 // pred_check
    _
  $region23: #{attention_forward.1} parent=0 // pred_check_branch
    %22 = sbr.rel (0) target = $region25
  $region24: #{attention_forward.1} parent=0 // pred_region
    _
  $region25: #{attention_forward.1} parent=0 // pred_fallthru
    _
  %v24 = vld [vmem:[%s0] sm:$0xff]
  %v25 = vld [vmem:[%s0 + $0x8] sm:$0xff]
  %v26 = vld [vmem:[%s0 + $0x10] sm:$0xff]
  %v27 = vld [vmem:[%s0 + $0x18] sm:$0xff]
  %v28 = vld [vmem:[%s0 + $0x20] sm:$0xff]
  %v29 = vld [vmem:[%s0 + $0x28] sm:$0xff]
  %v30 = vld [vmem:[%s0 + $0x30] sm:$0xff]
  %v31 = vld [vmem:[%s0 + $0x38] sm:$0xff]
  %32 = vxpose.xlu0.b32.start [1/16] %v24, 128
  %33 = vxpose.xlu0.b32.cont [2/16] %v25, 128
  %34 = vxpose.xlu0.b32.cont [3/16] %v26, 128
  %35 = vxpose.xlu0.b32.cont [4/16] %v27, 128
  %36 = vxpose.xlu0.b32.cont [5/16] %v28, 128
  %37 = vxpose.xlu0.b32.cont [6/16] %v29, 128
  %38 = vxpose.xlu0.b32.cont [7/16] %v30, 128
  %39 = vxpose.xlu0.b32.cont [8/16] %v31, 128
  %40 = vxpose.xlu0.b32.cont [9/16] 0.0, 128
  %41 = vxpose.xlu0.b32.cont [10/16] 0.0, 128
  %42 = vxpose.xlu0.b32.cont [11/16] 0.0, 128
  %43 = vxpose.xlu0.b32.cont [12/16] 0.0, 128
  %44 = vxpose.xlu0.b32.cont [13/16] 0.0, 128
  %45 = vxpose.xlu0.b32.cont [14/16] 0.0, 128
  %46 = vxpose.xlu0.b32.cont [15/16] 0.0, 128
  %47 = vxpose.xlu0.b32.end [16/16] 0.0, 128
  %v48 = vpop.trf.xlu0
  %v49 = vpop.trf.xlu0
  %v50 = vpop.trf.xlu0
  %v51 = vpop.trf.xlu0
  %v52 = vpop.trf.xlu0
  %v53 = vpop.trf.xlu0
  %v54 = vpop.trf.xlu0
  %v55 = vpop.trf.xlu0
  %v56 = vpop.trf.xlu0
  %v57 = vpop.trf.xlu0
  %v58 = vpop.trf.xlu0
  %v59 = vpop.trf.xlu0
  %v60 = vpop.trf.xlu0
  %v61 = vpop.trf.xlu0
  %v62 = vpop.trf.xlu0
  %v63 = vpop.trf.xlu0
  %s64 = scalar_lea.vmem %s0, 64
  %v65 = vld [vmem:[%s64] sm:$0xff]
  %v66 = vld [vmem:[%s64 + $0x8] sm:$0xff]
  %v67 = vld [vmem:[%s64 + $0x10] sm:$0xff]
  %v68 = vld [vmem:[%s64 + $0x18] sm:$0xff]
  %v69 = vld [vmem:[%s64 + $0x20] sm:$0xff]
  %v70 = vld [vmem:[%s64 + $0x28] sm:$0xff]
  %v71 = vld [vmem:[%s64 + $0x30] sm:$0xff]
  %v72 = vld [vmem:[%s64 + $0x38] sm:$0xff]
  %73 = vxpose.xlu0.b32.start [1/16] %v65, 128
  %74 = vxpose.xlu0.b32.cont [2/16] %v66, 128
  %75 = vxpose.xlu0.b32.cont [3/16] %v67, 128
  %76 = vxpose.xlu0.b32.cont [4/16] %v68, 128
  %77 = vxpose.xlu0.b32.cont [5/16] %v69, 128
  %78 = vxpose.xlu0.b32.cont [6/16] %v70, 128
  %79 = vxpose.xlu0.b32.cont [7/16] %v71, 128
  %80 = vxpose.xlu0.b32.cont [8/16] %v72, 128
  %81 = vxpose.xlu0.b32.cont [9/16] 0.0, 128
  %82 = vxpose.xlu0.b32.cont [10/16] 0.0, 128
  %83 = vxpose.xlu0.b32.cont [11/16] 0.0, 128
  %84 = vxpose.xlu0.b32.cont [12/16] 0.0, 128
  %85 = vxpose.xlu0.b32.cont [13/16] 0.0, 128
  %86 = vxpose.xlu0.b32.cont [14/16] 0.0, 128
  %87 = vxpose.xlu0.b32.cont [15/16] 0.0, 128
  %88 = vxpose.xlu0.b32.end [16/16] 0.0, 128
  %v89 = vpop.trf.xlu0
  %v90 = vpop.trf.xlu0
  %v91 = vpop.trf.xlu0
  %v92 = vpop.trf.xlu0
  %v93 = vpop.trf.xlu0
  %v94 = vpop.trf.xlu0
  %v95 = vpop.trf.xlu0
  %v96 = vpop.trf.xlu0
  %v97 = vpop.trf.xlu0
  %v98 = vpop.trf.xlu0
  %v99 = vpop.trf.xlu0
  %v100 = vpop.trf.xlu0
  %v101 = vpop.trf.xlu0
  %v102 = vpop.trf.xlu0
  %v103 = vpop.trf.xlu0
  %v104 = vpop.trf.xlu0
  %v105 = vpack.c.bf16 %v49, %v48
  %v106 = vpack.c.bf16 %v51, %v50
  %v107 = vpack.c.bf16 %v53, %v52
  %v108 = vpack.c.bf16 %v55, %v54
  %v109 = vpack.c.bf16 %v90, %v89
  %v110 = vpack.c.bf16 %v92, %v91
  %v111 = vpack.c.bf16 %v94, %v93
  %v112 = vpack.c.bf16 %v96, %v95
  %v113 = vld [vmem:[%s1] sm:$0xf]
  %v114 = vld [vmem:[%s1 + $0x4] sm:$0xf]
  %v115 = vld [vmem:[%s1 + $0x8] sm:$0xf]
  %v116 = vld [vmem:[%s1 + $0xc] sm:$0xf]
  %v117 = vld [vmem:[%s1 + $0x10] sm:$0xf]
  %v118 = vld [vmem:[%s1 + $0x14] sm:$0xf]
  %v119 = vld [vmem:[%s1 + $0x18] sm:$0xf]
  %v120 = vld [vmem:[%s1 + $0x1c] sm:$0xf]
  %v121 = vld [vmem:[%s2] sm:$0xf]
  %v122 = vld [vmem:[%s2 + $0x4] sm:$0xf]
  %v123 = vld [vmem:[%s2 + $0x8] sm:$0xf]
  %v124 = vld [vmem:[%s2 + $0xc] sm:$0xf]
  %v125 = vld [vmem:[%s2 + $0x10] sm:$0xf]
  %v126 = vld [vmem:[%s2 + $0x14] sm:$0xf]
  %v127 = vld [vmem:[%s2 + $0x18] sm:$0xf]
  %v128 = vld [vmem:[%s2 + $0x1c] sm:$0xf]
  %v129 = vld [vmem:[%s3] sm:$0xf]
  %v130 = vld [vmem:[%s3 + $0x4] sm:$0xf]
  %v131 = vld [vmem:[%s3 + $0x8] sm:$0xf]
  %v132 = vld [vmem:[%s3 + $0xc] sm:$0xf]
  %v133 = vld [vmem:[%s3 + $0x10] sm:$0xf]
  %v134 = vld [vmem:[%s3 + $0x14] sm:$0xf]
  %v135 = vld [vmem:[%s3 + $0x18] sm:$0xf]
  %v136 = vld [vmem:[%s3 + $0x1c] sm:$0xf]
  %v137 = vld [vmem:[%s4] sm:$0xf]
  %v138 = vld [vmem:[%s4 + $0x4] sm:$0xf]
  %v139 = vld [vmem:[%s4 + $0x8] sm:$0xf]
  %v140 = vld [vmem:[%s4 + $0xc] sm:$0xf]
  %v149 = vunpack.c.l.b16 %v113
  %v150 = vunpack.c.l.b16 %v114
  %v151 = vunpack.c.l.b16 %v115
  %v152 = vunpack.c.l.b16 %v116
  %v153 = vunpack.c.l.b16 %v117
  %v154 = vunpack.c.l.b16 %v118
  %v155 = vunpack.c.l.b16 %v119
  %v156 = vunpack.c.l.b16 %v120
  %v157 = vpack.c.b16 %v150, %v149
  %v158 = vpack.c.b16 %v152, %v151
  %v159 = vpack.c.b16 %v154, %v153
  %v160 = vpack.c.b16 %v156, %v155
  %vm165 = vcmask 523264
  %v167 = vsel %vm165, %v105, 0
  %v170 = vsel %vm165, %v106, 0
  %v173 = vsel %vm165, %v107, 0
  %v176 = vsel %vm165, %v108, 0
  %v179 = vsel %vm165, %v109, 0
  %v182 = vsel %vm165, %v110, 0
  %v185 = vsel %vm165, %v111, 0
  %v188 = vsel %vm165, %v112, 0
  %190 = vmatprep.subr.bf16.mxu0 0
  %191 = vmatpush1.bf16.msra.mxu0 0
  %192 = vmatprep.subr.bf16.mxu0 0
  %193 = vmatpush1.bf16.msra.mxu0 0
  %194 = vmatprep.subr.bf16.mxu0 0
  %195 = vmatpush1.bf16.msra.mxu0 0
  %196 = vmatprep.subr.bf16.mxu0 0
  %197 = vmatpush1.bf16.msra.mxu0 0
  %198 = vmatprep.subr.bf16.mxu0 0
  %199 = vmatpush1.bf16.msra.mxu0 %v160
  %200 = vmatprep.subr.bf16.mxu0 0
  %201 = vmatpush1.bf16.msra.mxu0 %v159
  %202 = vmatprep.subr.bf16.mxu0 0
  %203 = vmatpush1.bf16.msra.mxu0 %v158
  %204 = vmatprep.subr.bf16.mxu0 0
  %205 = vmatpush1.bf16.msra.mxu0 %v157
  %206 = vmatprep.subr.bf16.mxu0 0
  %207 = vmatpush2.bf16.msra.mxu0 0
  %208 = vmatprep.subr.bf16.mxu0 0
  %209 = vmatpush2.bf16.msra.mxu0 0
  %210 = vmatprep.subr.bf16.mxu0 0
  %211 = vmatpush2.bf16.msra.mxu0 0
  %212 = vmatprep.subr.bf16.mxu0 0
  %213 = vmatpush2.bf16.msra.mxu0 0
  %214 = vmatprep.subr.bf16.mxu0 0
  %215 = vmatpush2.bf16.msra.mxu0 0
  %216 = vmatprep.subr.bf16.mxu0 0
  %217 = vmatpush2.bf16.msra.mxu0 0
  %218 = vmatprep.subr.bf16.mxu0 0
  %219 = vmatpush2.bf16.msra.mxu0 0
  %220 = vmatprep.subr.bf16.mxu0 0
  %221 = vmatpush2.bf16.msra.mxu0 0
  %222 = vmatprep.mubr.bf16.mxu0 0
  %223 = vmatmul.mubr.bf16.gmra.mxu0 %v167
  %v224 = vpop.f32.mrf.mxu0
  %v225 = vadd.f32 0.0, %v224
  %v226 = vpop.f32.mrf.mxu0
  %v227 = vpop.f32.mrf.mxu0
  %v228 = vadd.f32 0.0, %v227
  %v229 = vpop.f32.mrf.mxu0
  %230 = vmatprep.mubr.bf16.mxu0 0
  %231 = vmatmul.mubr.bf16.gmra.mxu0 %v170
  %v232 = vpop.f32.mrf.mxu0
  %v233 = vadd.f32 0.0, %v232
  %v234 = vpop.f32.mrf.mxu0
  %v235 = vpop.f32.mrf.mxu0
  %v236 = vadd.f32 0.0, %v235
  %v237 = vpop.f32.mrf.mxu0
  %238 = vmatprep.mubr.bf16.mxu0 0
  %239 = vmatmul.mubr.bf16.gmra.mxu0 %v173
  %v240 = vpop.f32.mrf.mxu0
  %v241 = vadd.f32 0.0, %v240
  %v242 = vpop.f32.mrf.mxu0
  %v243 = vpop.f32.mrf.mxu0
  %v244 = vadd.f32 0.0, %v243
  %v245 = vpop.f32.mrf.mxu0
  %246 = vmatprep.mubr.bf16.mxu0 0
  %247 = vmatmul.mubr.bf16.gmra.mxu0 %v176
  %v248 = vpop.f32.mrf.mxu0
  %v249 = vadd.f32 0.0, %v248
  %v250 = vpop.f32.mrf.mxu0
  %v251 = vpop.f32.mrf.mxu0
  %v252 = vadd.f32 0.0, %v251
  %v253 = vpop.f32.mrf.mxu0
  %254 = vmatprep.mubr.bf16.mxu0 0
  %255 = vmatmul.mubr.bf16.gmra.mxu0 %v179
  %v256 = vpop.f32.mrf.mxu0
  %v257 = vadd.f32 0.0, %v256
  %v258 = vpop.f32.mrf.mxu0
  %v259 = vpop.f32.mrf.mxu0
  %v260 = vadd.f32 0.0, %v259
  %v261 = vpop.f32.mrf.mxu0
  %262 = vmatprep.mubr.bf16.mxu0 0
  %263 = vmatmul.mubr.bf16.gmra.mxu0 %v182
  %v264 = vpop.f32.mrf.mxu0
  %v265 = vadd.f32 0.0, %v264
  %v266 = vpop.f32.mrf.mxu0
  %v267 = vpop.f32.mrf.mxu0
  %v268 = vadd.f32 0.0, %v267
  %v269 = vpop.f32.mrf.mxu0
  %270 = vmatprep.mubr.bf16.mxu0 0
  %271 = vmatmul.mubr.bf16.gmra.mxu0 %v185
  %v272 = vpop.f32.mrf.mxu0
  %v273 = vadd.f32 0.0, %v272
  %v274 = vpop.f32.mrf.mxu0
  %v275 = vpop.f32.mrf.mxu0
  %v276 = vadd.f32 0.0, %v275
  %v277 = vpop.f32.mrf.mxu0
  %278 = vmatprep.mubr.bf16.mxu0 0
  %279 = vmatmul.mubr.bf16.gmra.mxu0 %v188
  %v280 = vpop.f32.mrf.mxu0
  %v281 = vadd.f32 0.0, %v280
  %v282 = vpop.f32.mrf.mxu0
  %v283 = vpop.f32.mrf.mxu0
  %v284 = vadd.f32 0.0, %v283
  %v285 = vpop.f32.mrf.mxu0
  %286 = vdwg.mxu0
  %v295 = vunpack.c.l.b16 %v121
  %v296 = vunpack.c.l.b16 %v122
  %v297 = vunpack.c.l.b16 %v123
  %v298 = vunpack.c.l.b16 %v124
  %v299 = vunpack.c.l.b16 %v125
  %v300 = vunpack.c.l.b16 %v126
  %v301 = vunpack.c.l.b16 %v127
  %v302 = vunpack.c.l.b16 %v128
  %v303 = vpack.c.b16 %v296, %v295
  %v304 = vpack.c.b16 %v298, %v297
  %v305 = vpack.c.b16 %v300, %v299
  %v306 = vpack.c.b16 %v302, %v301
  %311 = vmatprep.subr.bf16.mxu0 0
  %312 = vmatpush1.bf16.msra.mxu0 0
  %313 = vmatprep.subr.bf16.mxu0 0
  %314 = vmatpush1.bf16.msra.mxu0 0
  %315 = vmatprep.subr.bf16.mxu0 0
  %316 = vmatpush1.bf16.msra.mxu0 0
  %317 = vmatprep.subr.bf16.mxu0 0
  %318 = vmatpush1.bf16.msra.mxu0 0
  %319 = vmatprep.subr.bf16.mxu0 0
  %320 = vmatpush1.bf16.msra.mxu0 %v306
  %321 = vmatprep.subr.bf16.mxu0 0
  %322 = vmatpush1.bf16.msra.mxu0 %v305
  %323 = vmatprep.subr.bf16.mxu0 0
  %324 = vmatpush1.bf16.msra.mxu0 %v304
  %325 = vmatprep.subr.bf16.mxu0 0
  %326 = vmatpush1.bf16.msra.mxu0 %v303
  %327 = vmatprep.subr.bf16.mxu0 0
  %328 = vmatpush2.bf16.msra.mxu0 0
  %329 = vmatprep.subr.bf16.mxu0 0
  %330 = vmatpush2.bf16.msra.mxu0 0
  %331 = vmatprep.subr.bf16.mxu0 0
  %332 = vmatpush2.bf16.msra.mxu0 0
  %333 = vmatprep.subr.bf16.mxu0 0
  %334 = vmatpush2.bf16.msra.mxu0 0
  %335 = vmatprep.subr.bf16.mxu0 0
  %336 = vmatpush2.bf16.msra.mxu0 0
  %337 = vmatprep.subr.bf16.mxu0 0
  %338 = vmatpush2.bf16.msra.mxu0 0
  %339 = vmatprep.subr.bf16.mxu0 0
  %340 = vmatpush2.bf16.msra.mxu0 0
  %341 = vmatprep.subr.bf16.mxu0 0
  %342 = vmatpush2.bf16.msra.mxu0 0
  %343 = vmatprep.mubr.bf16.mxu0 0
  %344 = vmatmul.mubr.bf16.gmra.mxu0 %v167
  %v345 = vpop.f32.mrf.mxu0
  %v346 = vadd.f32 0.0, %v345
  %v347 = vpop.f32.mrf.mxu0
  %v348 = vpop.f32.mrf.mxu0
  %v349 = vadd.f32 0.0, %v348
  %v350 = vpop.f32.mrf.mxu0
  %351 = vmatprep.mubr.bf16.mxu0 0
  %352 = vmatmul.mubr.bf16.gmra.mxu0 %v170
  %v353 = vpop.f32.mrf.mxu0
  %v354 = vadd.f32 0.0, %v353
  %v355 = vpop.f32.mrf.mxu0
  %v356 = vpop.f32.mrf.mxu0
  %v357 = vadd.f32 0.0, %v356
  %v358 = vpop.f32.mrf.mxu0
  %359 = vmatprep.mubr.bf16.mxu0 0
  %360 = vmatmul.mubr.bf16.gmra.mxu0 %v173
  %v361 = vpop.f32.mrf.mxu0
  %v362 = vadd.f32 0.0, %v361
  %v363 = vpop.f32.mrf.mxu0
  %v364 = vpop.f32.mrf.mxu0
  %v365 = vadd.f32 0.0, %v364
  %v366 = vpop.f32.mrf.mxu0
  %367 = vmatprep.mubr.bf16.mxu0 0
  %368 = vmatmul.mubr.bf16.gmra.mxu0 %v176
  %v369 = vpop.f32.mrf.mxu0
  %v370 = vadd.f32 0.0, %v369
  %v371 = vpop.f32.mrf.mxu0
  %v372 = vpop.f32.mrf.mxu0
  %v373 = vadd.f32 0.0, %v372
  %v374 = vpop.f32.mrf.mxu0
  %375 = vmatprep.mubr.bf16.mxu0 0
  %376 = vmatmul.mubr.bf16.gmra.mxu0 %v179
  %v377 = vpop.f32.mrf.mxu0
  %v378 = vadd.f32 0.0, %v377
  %v379 = vpop.f32.mrf.mxu0
  %v380 = vpop.f32.mrf.mxu0
  %v381 = vadd.f32 0.0, %v380
  %v382 = vpop.f32.mrf.mxu0
  %383 = vmatprep.mubr.bf16.mxu0 0
  %384 = vmatmul.mubr.bf16.gmra.mxu0 %v182
  %v385 = vpop.f32.mrf.mxu0
  %v386 = vadd.f32 0.0, %v385
  %v387 = vpop.f32.mrf.mxu0
  %v388 = vpop.f32.mrf.mxu0
  %v389 = vadd.f32 0.0, %v388
  %v390 = vpop.f32.mrf.mxu0
  %391 = vmatprep.mubr.bf16.mxu0 0
  %392 = vmatmul.mubr.bf16.gmra.mxu0 %v185
  %v393 = vpop.f32.mrf.mxu0
  %v394 = vadd.f32 0.0, %v393
  %v395 = vpop.f32.mrf.mxu0
  %v396 = vpop.f32.mrf.mxu0
  %v397 = vadd.f32 0.0, %v396
  %v398 = vpop.f32.mrf.mxu0
  %399 = vmatprep.mubr.bf16.mxu0 0
  %400 = vmatmul.mubr.bf16.gmra.mxu0 %v188
  %v401 = vpop.f32.mrf.mxu0
  %v402 = vadd.f32 0.0, %v401
  %v403 = vpop.f32.mrf.mxu0
  %v404 = vpop.f32.mrf.mxu0
  %v405 = vadd.f32 0.0, %v404
  %v406 = vpop.f32.mrf.mxu0
  %407 = vdwg.mxu0
  %v416 = vunpack.c.l.b16 %v129
  %v417 = vunpack.c.l.b16 %v130
  %v418 = vunpack.c.l.b16 %v131
  %v419 = vunpack.c.l.b16 %v132
  %v420 = vunpack.c.l.b16 %v133
  %v421 = vunpack.c.l.b16 %v134
  %v422 = vunpack.c.l.b16 %v135
  %v423 = vunpack.c.l.b16 %v136
  %v424 = vpack.c.b16 %v417, %v416
  %v425 = vpack.c.b16 %v419, %v418
  %v426 = vpack.c.b16 %v421, %v420
  %v427 = vpack.c.b16 %v423, %v422
  %432 = vmatprep.subr.bf16.mxu0 0
  %433 = vmatpush1.bf16.msra.mxu0 0
  %434 = vmatprep.subr.bf16.mxu0 0
  %435 = vmatpush1.bf16.msra.mxu0 0
  %436 = vmatprep.subr.bf16.mxu0 0
  %437 = vmatpush1.bf16.msra.mxu0 0
  %438 = vmatprep.subr.bf16.mxu0 0
  %439 = vmatpush1.bf16.msra.mxu0 0
  %440 = vmatprep.subr.bf16.mxu0 0
  %441 = vmatpush1.bf16.msra.mxu0 %v427
  %442 = vmatprep.subr.bf16.mxu0 0
  %443 = vmatpush1.bf16.msra.mxu0 %v426
  %444 = vmatprep.subr.bf16.mxu0 0
  %445 = vmatpush1.bf16.msra.mxu0 %v425
  %446 = vmatprep.subr.bf16.mxu0 0
  %447 = vmatpush1.bf16.msra.mxu0 %v424
  %448 = vmatprep.subr.bf16.mxu0 0
  %449 = vmatpush2.bf16.msra.mxu0 0
  %450 = vmatprep.subr.bf16.mxu0 0
  %451 = vmatpush2.bf16.msra.mxu0 0
  %452 = vmatprep.subr.bf16.mxu0 0
  %453 = vmatpush2.bf16.msra.mxu0 0
  %454 = vmatprep.subr.bf16.mxu0 0
  %455 = vmatpush2.bf16.msra.mxu0 0
  %456 = vmatprep.subr.bf16.mxu0 0
  %457 = vmatpush2.bf16.msra.mxu0 0
  %458 = vmatprep.subr.bf16.mxu0 0
  %459 = vmatpush2.bf16.msra.mxu0 0
  %460 = vmatprep.subr.bf16.mxu0 0
  %461 = vmatpush2.bf16.msra.mxu0 0
  %462 = vmatprep.subr.bf16.mxu0 0
  %463 = vmatpush2.bf16.msra.mxu0 0
  %464 = vmatprep.mubr.bf16.mxu0 0
  %465 = vmatmul.mubr.bf16.gmra.mxu0 %v167
  %v466 = vpop.f32.mrf.mxu0
  %v467 = vadd.f32 0.0, %v466
  %v468 = vpop.f32.mrf.mxu0
  %v469 = vpop.f32.mrf.mxu0
  %v470 = vadd.f32 0.0, %v469
  %v471 = vpop.f32.mrf.mxu0
  %472 = vmatprep.mubr.bf16.mxu0 0
  %473 = vmatmul.mubr.bf16.gmra.mxu0 %v170
  %v474 = vpop.f32.mrf.mxu0
  %v475 = vadd.f32 0.0, %v474
  %v476 = vpop.f32.mrf.mxu0
  %v477 = vpop.f32.mrf.mxu0
  %v478 = vadd.f32 0.0, %v477
  %v479 = vpop.f32.mrf.mxu0
  %480 = vmatprep.mubr.bf16.mxu0 0
  %481 = vmatmul.mubr.bf16.gmra.mxu0 %v173
  %v482 = vpop.f32.mrf.mxu0
  %v483 = vadd.f32 0.0, %v482
  %v484 = vpop.f32.mrf.mxu0
  %v485 = vpop.f32.mrf.mxu0
  %v486 = vadd.f32 0.0, %v485
  %v487 = vpop.f32.mrf.mxu0
  %488 = vmatprep.mubr.bf16.mxu0 0
  %489 = vmatmul.mubr.bf16.gmra.mxu0 %v176
  %v490 = vpop.f32.mrf.mxu0
  %v491 = vadd.f32 0.0, %v490
  %v492 = vpop.f32.mrf.mxu0
  %v493 = vpop.f32.mrf.mxu0
  %v494 = vadd.f32 0.0, %v493
  %v495 = vpop.f32.mrf.mxu0
  %496 = vmatprep.mubr.bf16.mxu0 0
  %497 = vmatmul.mubr.bf16.gmra.mxu0 %v179
  %v498 = vpop.f32.mrf.mxu0
  %v499 = vadd.f32 0.0, %v498
  %v500 = vpop.f32.mrf.mxu0
  %v501 = vpop.f32.mrf.mxu0
  %v502 = vadd.f32 0.0, %v501
  %v503 = vpop.f32.mrf.mxu0
  %504 = vmatprep.mubr.bf16.mxu0 0
  %505 = vmatmul.mubr.bf16.gmra.mxu0 %v182
  %v506 = vpop.f32.mrf.mxu0
  %v507 = vadd.f32 0.0, %v506
  %v508 = vpop.f32.mrf.mxu0
  %v509 = vpop.f32.mrf.mxu0
  %v510 = vadd.f32 0.0, %v509
  %v511 = vpop.f32.mrf.mxu0
  %512 = vmatprep.mubr.bf16.mxu0 0
  %513 = vmatmul.mubr.bf16.gmra.mxu0 %v185
  %v514 = vpop.f32.mrf.mxu0
  %v515 = vadd.f32 0.0, %v514
  %v516 = vpop.f32.mrf.mxu0
  %v517 = vpop.f32.mrf.mxu0
  %v518 = vadd.f32 0.0, %v517
  %v519 = vpop.f32.mrf.mxu0
  %520 = vmatprep.mubr.bf16.mxu0 0
  %521 = vmatmul.mubr.bf16.gmra.mxu0 %v188
  %v522 = vpop.f32.mrf.mxu0
  %v523 = vadd.f32 0.0, %v522
  %v524 = vpop.f32.mrf.mxu0
  %v525 = vpop.f32.mrf.mxu0
  %v526 = vadd.f32 0.0, %v525
  %v527 = vpop.f32.mrf.mxu0
  %528 = vdwg.mxu0
  %v529 = vpack.c.bf16 %v228, %v225
  %v530 = vpack.c.bf16 %v236, %v233
  %v531 = vpack.c.bf16 %v244, %v241
  %v532 = vpack.c.bf16 %v252, %v249
  %v533 = vpack.c.bf16 %v260, %v257
  %v534 = vpack.c.bf16 %v268, %v265
  %v535 = vpack.c.bf16 %v276, %v273
  %v536 = vpack.c.bf16 %v284, %v281
  %v537 = vpack.c.bf16 %v349, %v346
  %v538 = vpack.c.bf16 %v357, %v354
  %v539 = vpack.c.bf16 %v365, %v362
  %v540 = vpack.c.bf16 %v373, %v370
  %v541 = vpack.c.bf16 %v381, %v378
  %v542 = vpack.c.bf16 %v389, %v386
  %v543 = vpack.c.bf16 %v397, %v394
  %v544 = vpack.c.bf16 %v405, %v402
  %v545 = vpack.c.bf16 %v470, %v467
  %v546 = vpack.c.bf16 %v478, %v475
  %v547 = vpack.c.bf16 %v486, %v483
  %v548 = vpack.c.bf16 %v494, %v491
  %v549 = vpack.c.bf16 %v502, %v499
  %v550 = vpack.c.bf16 %v510, %v507
  %v551 = vpack.c.bf16 %v518, %v515
  %v552 = vpack.c.bf16 %v526, %v523
  %vm553 = vcmask 261120
  %v555 = vsel %vm553, %v529, 0
  %v558 = vsel %vm553, %v530, 0
  %v561 = vsel %vm553, %v531, 0
  %v564 = vsel %vm553, %v532, 0
  %v567 = vsel %vm553, %v537, 0
  %v570 = vsel %vm553, %v538, 0
  %v573 = vsel %vm553, %v539, 0
  %v576 = vsel %vm553, %v540, 0
  %578 = vmatprep.subr.bf16.mxu0 0
  %579 = vmatpush1.bf16.xpose.msra.mxu0 0
  %580 = vmatprep.subr.bf16.mxu0 0
  %581 = vmatpush1.bf16.xpose.msra.mxu0 0
  %582 = vmatprep.subr.bf16.mxu0 0
  %583 = vmatpush1.bf16.xpose.msra.mxu0 0
  %584 = vmatprep.subr.bf16.mxu0 0
  %585 = vmatpush1.bf16.xpose.msra.mxu0 0
  %586 = vmatprep.subr.bf16.mxu0 0
  %587 = vmatpush1.bf16.xpose.msra.mxu0 %v576
  %588 = vmatprep.subr.bf16.mxu0 0
  %589 = vmatpush1.bf16.xpose.msra.mxu0 %v573
  %590 = vmatprep.subr.bf16.mxu0 0
  %591 = vmatpush1.bf16.xpose.msra.mxu0 %v570
  %592 = vmatprep.subr.bf16.mxu0 0
  %593 = vmatpush1.bf16.xpose.msra.mxu0 %v567
  %594 = vmatprep.subr.bf16.mxu0 0
  %595 = vmatpush2.bf16.xpose.msra.mxu0 0
  %596 = vmatprep.subr.bf16.mxu0 0
  %597 = vmatpush2.bf16.xpose.msra.mxu0 0
  %598 = vmatprep.subr.bf16.mxu0 0
  %599 = vmatpush2.bf16.xpose.msra.mxu0 0
  %600 = vmatprep.subr.bf16.mxu0 0
  %601 = vmatpush2.bf16.xpose.msra.mxu0 0
  %602 = vmatprep.subr.bf16.mxu0 0
  %603 = vmatpush2.bf16.xpose.msra.mxu0 0
  %604 = vmatprep.subr.bf16.mxu0 0
  %605 = vmatpush2.bf16.xpose.msra.mxu0 0
  %606 = vmatprep.subr.bf16.mxu0 0
  %607 = vmatpush2.bf16.xpose.msra.mxu0 0
  %608 = vmatprep.subr.bf16.mxu0 0
  %609 = vmatpush2.bf16.xpose.msra.mxu0 0
  %610 = vmatprep.mubr.bf16.mxu0 0
  %611 = vmatmul.mubr.bf16.gmra.mxu0 %v555
  %v612 = vpop.f32.mrf.mxu0
  %v613 = vadd.f32 0.0, %v612
  %v614 = vpop.f32.mrf.mxu0
  %v615 = vpop.f32.mrf.mxu0
  %v616 = vadd.f32 0.0, %v615
  %v617 = vpop.f32.mrf.mxu0
  %618 = vmatprep.mubr.bf16.mxu0 0
  %619 = vmatmul.mubr.bf16.gmra.mxu0 %v558
  %v620 = vpop.f32.mrf.mxu0
  %v621 = vadd.f32 0.0, %v620
  %v622 = vpop.f32.mrf.mxu0
  %v623 = vpop.f32.mrf.mxu0
  %v624 = vadd.f32 0.0, %v623
  %v625 = vpop.f32.mrf.mxu0
  %626 = vmatprep.mubr.bf16.mxu0 0
  %627 = vmatmul.mubr.bf16.gmra.mxu0 %v561
  %v628 = vpop.f32.mrf.mxu0
  %v629 = vadd.f32 0.0, %v628
  %v630 = vpop.f32.mrf.mxu0
  %v631 = vpop.f32.mrf.mxu0
  %v632 = vadd.f32 0.0, %v631
  %v633 = vpop.f32.mrf.mxu0
  %634 = vmatprep.mubr.bf16.mxu0 0
  %635 = vmatmul.mubr.bf16.gmra.mxu0 %v564
  %v636 = vpop.f32.mrf.mxu0
  %v637 = vadd.f32 0.0, %v636
  %v638 = vpop.f32.mrf.mxu0
  %v639 = vpop.f32.mrf.mxu0
  %v640 = vadd.f32 0.0, %v639
  %v641 = vpop.f32.mrf.mxu0
  %642 = vdwg.mxu0
  %v644 = vsel %vm553, %v533, 0
  %v647 = vsel %vm553, %v534, 0
  %v650 = vsel %vm553, %v535, 0
  %v653 = vsel %vm553, %v536, 0
  %v656 = vsel %vm553, %v541, 0
  %v659 = vsel %vm553, %v542, 0
  %v662 = vsel %vm553, %v543, 0
  %v665 = vsel %vm553, %v544, 0
  %667 = vmatprep.subr.bf16.mxu0 0
  %668 = vmatpush1.bf16.xpose.msra.mxu0 0
  %669 = vmatprep.subr.bf16.mxu0 0
  %670 = vmatpush1.bf16.xpose.msra.mxu0 0
  %671 = vmatprep.subr.bf16.mxu0 0
  %672 = vmatpush1.bf16.xpose.msra.mxu0 0
  %673 = vmatprep.subr.bf16.mxu0 0
  %674 = vmatpush1.bf16.xpose.msra.mxu0 0
  %675 = vmatprep.subr.bf16.mxu0 0
  %676 = vmatpush1.bf16.xpose.msra.mxu0 %v665
  %677 = vmatprep.subr.bf16.mxu0 0
  %678 = vmatpush1.bf16.xpose.msra.mxu0 %v662
  %679 = vmatprep.subr.bf16.mxu0 0
  %680 = vmatpush1.bf16.xpose.msra.mxu0 %v659
  %681 = vmatprep.subr.bf16.mxu0 0
  %682 = vmatpush1.bf16.xpose.msra.mxu0 %v656
  %683 = vmatprep.subr.bf16.mxu0 0
  %684 = vmatpush2.bf16.xpose.msra.mxu0 0
  %685 = vmatprep.subr.bf16.mxu0 0
  %686 = vmatpush2.bf16.xpose.msra.mxu0 0
  %687 = vmatprep.subr.bf16.mxu0 0
  %688 = vmatpush2.bf16.xpose.msra.mxu0 0
  %689 = vmatprep.subr.bf16.mxu0 0
  %690 = vmatpush2.bf16.xpose.msra.mxu0 0
  %691 = vmatprep.subr.bf16.mxu0 0
  %692 = vmatpush2.bf16.xpose.msra.mxu0 0
  %693 = vmatprep.subr.bf16.mxu0 0
  %694 = vmatpush2.bf16.xpose.msra.mxu0 0
  %695 = vmatprep.subr.bf16.mxu0 0
  %696 = vmatpush2.bf16.xpose.msra.mxu0 0
  %697 = vmatprep.subr.bf16.mxu0 0
  %698 = vmatpush2.bf16.xpose.msra.mxu0 0
  %699 = vmatprep.mubr.bf16.mxu0 0
  %700 = vmatmul.mubr.bf16.gmra.mxu0 %v644
  %v701 = vpop.f32.mrf.mxu0
  %v702 = vadd.f32 0.0, %v701
  %v703 = vpop.f32.mrf.mxu0
  %v704 = vpop.f32.mrf.mxu0
  %v705 = vadd.f32 0.0, %v704
  %v706 = vpop.f32.mrf.mxu0
  %707 = vmatprep.mubr.bf16.mxu0 0
  %708 = vmatmul.mubr.bf16.gmra.mxu0 %v647
  %v709 = vpop.f32.mrf.mxu0
  %v710 = vadd.f32 0.0, %v709
  %v711 = vpop.f32.mrf.mxu0
  %v712 = vpop.f32.mrf.mxu0
  %v713 = vadd.f32 0.0, %v712
  %v714 = vpop.f32.mrf.mxu0
  %715 = vmatprep.mubr.bf16.mxu0 0
  %716 = vmatmul.mubr.bf16.gmra.mxu0 %v650
  %v717 = vpop.f32.mrf.mxu0
  %v718 = vadd.f32 0.0, %v717
  %v719 = vpop.f32.mrf.mxu0
  %v720 = vpop.f32.mrf.mxu0
  %v721 = vadd.f32 0.0, %v720
  %v722 = vpop.f32.mrf.mxu0
  %723 = vmatprep.mubr.bf16.mxu0 0
  %724 = vmatmul.mubr.bf16.gmra.mxu0 %v653
  %v725 = vpop.f32.mrf.mxu0
  %v726 = vadd.f32 0.0, %v725
  %v727 = vpop.f32.mrf.mxu0
  %v728 = vpop.f32.mrf.mxu0
  %v729 = vadd.f32 0.0, %v728
  %v730 = vpop.f32.mrf.mxu0
  %731 = vdwg.mxu0
  %v732 = vsel %vm165, %v613, -inf
  %733 = vmax.xlane.f32.xlu0 %v732
  %v734 = vpop.xlane.xlu0 %733
  %v735 = vsel %vm165, %v616, -inf
  %736 = vmax.xlane.f32.xlu0 %v735
  %v737 = vpop.xlane.xlu0 %736
  %v738 = vsel %vm165, %v621, -inf
  %739 = vmax.xlane.f32.xlu0 %v738
  %v740 = vpop.xlane.xlu0 %739
  %v741 = vsel %vm165, %v624, -inf
  %742 = vmax.xlane.f32.xlu0 %v741
  %v743 = vpop.xlane.xlu0 %742
  %v744 = vsel %vm165, %v629, -inf
  %745 = vmax.xlane.f32.xlu0 %v744
  %v746 = vpop.xlane.xlu0 %745
  %v747 = vsel %vm165, %v632, -inf
  %748 = vmax.xlane.f32.xlu0 %v747
  %v749 = vpop.xlane.xlu0 %748
  %v750 = vsel %vm165, %v637, -inf
  %751 = vmax.xlane.f32.xlu0 %v750
  %v752 = vpop.xlane.xlu0 %751
  %v753 = vsel %vm165, %v640, -inf
  %754 = vmax.xlane.f32.xlu0 %v753
  %v755 = vpop.xlane.xlu0 %754
  %v756 = vsel %vm165, %v702, -inf
  %757 = vmax.xlane.f32.xlu0 %v756
  %v758 = vpop.xlane.xlu0 %757
  %v759 = vsel %vm165, %v705, -inf
  %760 = vmax.xlane.f32.xlu0 %v759
  %v761 = vpop.xlane.xlu0 %760
  %v762 = vsel %vm165, %v710, -inf
  %763 = vmax.xlane.f32.xlu0 %v762
  %v764 = vpop.xlane.xlu0 %763
  %v765 = vsel %vm165, %v713, -inf
  %766 = vmax.xlane.f32.xlu0 %v765
  %v767 = vpop.xlane.xlu0 %766
  %v768 = vsel %vm165, %v718, -inf
  %769 = vmax.xlane.f32.xlu0 %v768
  %v770 = vpop.xlane.xlu0 %769
  %v771 = vsel %vm165, %v721, -inf
  %772 = vmax.xlane.f32.xlu0 %v771
  %v773 = vpop.xlane.xlu0 %772
  %v774 = vsel %vm165, %v726, -inf
  %775 = vmax.xlane.f32.xlu0 %v774
  %v776 = vpop.xlane.xlu0 %775
  %v777 = vsel %vm165, %v729, -inf
  %778 = vmax.xlane.f32.xlu0 %v777
  %v779 = vpop.xlane.xlu0 %778
  %v780 = vsub.f32 %v613, %v734
  %v781 = vsub.f32 %v616, %v737
  %v782 = vsub.f32 %v621, %v740
  %v783 = vsub.f32 %v624, %v743
  %v784 = vsub.f32 %v629, %v746
  %v785 = vsub.f32 %v632, %v749
  %v786 = vsub.f32 %v637, %v752
  %v787 = vsub.f32 %v640, %v755
  %v788 = vsub.f32 %v702, %v758
  %v789 = vsub.f32 %v705, %v761
  %v790 = vsub.f32 %v710, %v764
  %v791 = vsub.f32 %v713, %v767
  %v792 = vsub.f32 %v718, %v770
  %v793 = vsub.f32 %v721, %v773
  %v794 = vsub.f32 %v726, %v776
  %v795 = vsub.f32 %v729, %v779
  %v796 = vmul.f32 %v780, 1.442695
  %v797 = vpow.pop %v796
  %v798 = vmul.f32 %v781, 1.442695
  %v799 = vpow.pop %v798
  %v800 = vmul.f32 %v782, 1.442695
  %v801 = vpow.pop %v800
  %v802 = vmul.f32 %v783, 1.442695
  %v803 = vpow.pop %v802
  %v804 = vmul.f32 %v784, 1.442695
  %v805 = vpow.pop %v804
  %v806 = vmul.f32 %v785, 1.442695
  %v807 = vpow.pop %v806
  %v808 = vmul.f32 %v786, 1.442695
  %v809 = vpow.pop %v808
  %v810 = vmul.f32 %v787, 1.442695
  %v811 = vpow.pop %v810
  %v812 = vmul.f32 %v788, 1.442695
  %v813 = vpow.pop %v812
  %v814 = vmul.f32 %v789, 1.442695
  %v815 = vpow.pop %v814
  %v816 = vmul.f32 %v790, 1.442695
  %v817 = vpow.pop %v816
  %v818 = vmul.f32 %v791, 1.442695
  %v819 = vpow.pop %v818
  %v820 = vmul.f32 %v792, 1.442695
  %v821 = vpow.pop %v820
  %v822 = vmul.f32 %v793, 1.442695
  %v823 = vpow.pop %v822
  %v824 = vmul.f32 %v794, 1.442695
  %v825 = vpow.pop %v824
  %v826 = vmul.f32 %v795, 1.442695
  %v827 = vpow.pop %v826
  %v828 = vsel %vm165, %v797, 0.0
  %829 = vadd.xlane.f32.xlu0 %v828
  %v830 = vpop.xlane.xlu0 %829
  %v831 = vsel %vm165, %v799, 0.0
  %832 = vadd.xlane.f32.xlu0 %v831
  %v833 = vpop.xlane.xlu0 %832
  %v834 = vsel %vm165, %v801, 0.0
  %835 = vadd.xlane.f32.xlu0 %v834
  %v836 = vpop.xlane.xlu0 %835
  %v837 = vsel %vm165, %v803, 0.0
  %838 = vadd.xlane.f32.xlu0 %v837
  %v839 = vpop.xlane.xlu0 %838
  %v840 = vsel %vm165, %v805, 0.0
  %841 = vadd.xlane.f32.xlu0 %v840
  %v842 = vpop.xlane.xlu0 %841
  %v843 = vsel %vm165, %v807, 0.0
  %844 = vadd.xlane.f32.xlu0 %v843
  %v845 = vpop.xlane.xlu0 %844
  %v846 = vsel %vm165, %v809, 0.0
  %847 = vadd.xlane.f32.xlu0 %v846
  %v848 = vpop.xlane.xlu0 %847
  %v849 = vsel %vm165, %v811, 0.0
  %850 = vadd.xlane.f32.xlu0 %v849
  %v851 = vpop.xlane.xlu0 %850
  %v852 = vsel %vm165, %v813, 0.0
  %853 = vadd.xlane.f32.xlu0 %v852
  %v854 = vpop.xlane.xlu0 %853
  %v855 = vsel %vm165, %v815, 0.0
  %856 = vadd.xlane.f32.xlu0 %v855
  %v857 = vpop.xlane.xlu0 %856
  %v858 = vsel %vm165, %v817, 0.0
  %859 = vadd.xlane.f32.xlu0 %v858
  %v860 = vpop.xlane.xlu0 %859
  %v861 = vsel %vm165, %v819, 0.0
  %862 = vadd.xlane.f32.xlu0 %v861
  %v863 = vpop.xlane.xlu0 %862
  %v864 = vsel %vm165, %v821, 0.0
  %865 = vadd.xlane.f32.xlu0 %v864
  %v866 = vpop.xlane.xlu0 %865
  %v867 = vsel %vm165, %v823, 0.0
  %868 = vadd.xlane.f32.xlu0 %v867
  %v869 = vpop.xlane.xlu0 %868
  %v870 = vsel %vm165, %v825, 0.0
  %871 = vadd.xlane.f32.xlu0 %v870
  %v872 = vpop.xlane.xlu0 %871
  %v873 = vsel %vm165, %v827, 0.0
  %874 = vadd.xlane.f32.xlu0 %v873
  %v875 = vpop.xlane.xlu0 %874
  %v876 = vrcp.pop %v830
  %v877 = vrcp.pop %v833
  %v878 = vrcp.pop %v836
  %v879 = vrcp.pop %v839
  %v880 = vrcp.pop %v842
  %v881 = vrcp.pop %v845
  %v882 = vrcp.pop %v848
  %v883 = vrcp.pop %v851
  %v884 = vrcp.pop %v854
  %v885 = vrcp.pop %v857
  %v886 = vrcp.pop %v860
  %v887 = vrcp.pop %v863
  %v888 = vrcp.pop %v866
  %v889 = vrcp.pop %v869
  %v890 = vrcp.pop %v872
  %v891 = vrcp.pop %v875
  %v892 = vmul.f32 %v797, %v876
  %v893 = vmul.f32 %v799, %v877
  %v894 = vmul.f32 %v801, %v878
  %v895 = vmul.f32 %v803, %v879
  %v896 = vmul.f32 %v805, %v880
  %v897 = vmul.f32 %v807, %v881
  %v898 = vmul.f32 %v809, %v882
  %v899 = vmul.f32 %v811, %v883
  %v900 = vmul.f32 %v813, %v884
  %v901 = vmul.f32 %v815, %v885
  %v902 = vmul.f32 %v817, %v886
  %v903 = vmul.f32 %v819, %v887
  %v904 = vmul.f32 %v821, %v888
  %v905 = vmul.f32 %v823, %v889
  %v906 = vmul.f32 %v825, %v890
  %v907 = vmul.f32 %v827, %v891
  %v908 = vpack.c.bf16 %v893, %v892
  %v909 = vpack.c.bf16 %v895, %v894
  %v910 = vpack.c.bf16 %v897, %v896
  %v911 = vpack.c.bf16 %v899, %v898
  %v912 = vpack.c.bf16 %v901, %v900
  %v913 = vpack.c.bf16 %v903, %v902
  %v914 = vpack.c.bf16 %v905, %v904
  %v915 = vpack.c.bf16 %v907, %v906
  %v917 = vsel %vm165, %v908, 0
  %v920 = vsel %vm165, %v909, 0
  %v923 = vsel %vm165, %v910, 0
  %v926 = vsel %vm165, %v911, 0
  %928 = vmatprep.subr.bf16.mxu0 0
  %929 = vmatpush1.bf16.msra.mxu0 0
  %930 = vmatprep.subr.bf16.mxu0 0
  %931 = vmatpush1.bf16.msra.mxu0 0
  %932 = vmatprep.subr.bf16.mxu0 0
  %933 = vmatpush1.bf16.msra.mxu0 0
  %934 = vmatprep.subr.bf16.mxu0 0
  %935 = vmatpush1.bf16.msra.mxu0 0
  %936 = vmatprep.subr.bf16.mxu0 0
  %937 = vmatpush1.bf16.msra.mxu0 %v548
  %938 = vmatprep.subr.bf16.mxu0 0
  %939 = vmatpush1.bf16.msra.mxu0 %v547
  %940 = vmatprep.subr.bf16.mxu0 0
  %941 = vmatpush1.bf16.msra.mxu0 %v546
  %942 = vmatprep.subr.bf16.mxu0 0
  %943 = vmatpush1.bf16.msra.mxu0 %v545
  %944 = vmatprep.subr.bf16.mxu0 0
  %945 = vmatpush2.bf16.msra.mxu0 0
  %946 = vmatprep.subr.bf16.mxu0 0
  %947 = vmatpush2.bf16.msra.mxu0 0
  %948 = vmatprep.subr.bf16.mxu0 0
  %949 = vmatpush2.bf16.msra.mxu0 0
  %950 = vmatprep.subr.bf16.mxu0 0
  %951 = vmatpush2.bf16.msra.mxu0 0
  %952 = vmatprep.subr.bf16.mxu0 0
  %953 = vmatpush2.bf16.msra.mxu0 0
  %954 = vmatprep.subr.bf16.mxu0 0
  %955 = vmatpush2.bf16.msra.mxu0 0
  %956 = vmatprep.subr.bf16.mxu0 0
  %957 = vmatpush2.bf16.msra.mxu0 0
  %958 = vmatprep.subr.bf16.mxu0 0
  %959 = vmatpush2.bf16.msra.mxu0 0
  %960 = vmatprep.mubr.bf16.mxu0 0
  %961 = vmatmul.mubr.bf16.gmra.mxu0 %v917
  %v962 = vpop.f32.mrf.mxu0
  %v963 = vadd.f32 0.0, %v962
  %v964 = vpop.f32.mrf.mxu0
  %v965 = vpop.f32.mrf.mxu0
  %v966 = vadd.f32 0.0, %v965
  %v967 = vpop.f32.mrf.mxu0
  %968 = vmatprep.mubr.bf16.mxu0 0
  %969 = vmatmul.mubr.bf16.gmra.mxu0 %v920
  %v970 = vpop.f32.mrf.mxu0
  %v971 = vadd.f32 0.0, %v970
  %v972 = vpop.f32.mrf.mxu0
  %v973 = vpop.f32.mrf.mxu0
  %v974 = vadd.f32 0.0, %v973
  %v975 = vpop.f32.mrf.mxu0
  %976 = vmatprep.mubr.bf16.mxu0 0
  %977 = vmatmul.mubr.bf16.gmra.mxu0 %v923
  %v978 = vpop.f32.mrf.mxu0
  %v979 = vadd.f32 0.0, %v978
  %v980 = vpop.f32.mrf.mxu0
  %v981 = vpop.f32.mrf.mxu0
  %v982 = vadd.f32 0.0, %v981
  %v983 = vpop.f32.mrf.mxu0
  %984 = vmatprep.mubr.bf16.mxu0 0
  %985 = vmatmul.mubr.bf16.gmra.mxu0 %v926
  %v986 = vpop.f32.mrf.mxu0
  %v987 = vadd.f32 0.0, %v986
  %v988 = vpop.f32.mrf.mxu0
  %v989 = vpop.f32.mrf.mxu0
  %v990 = vadd.f32 0.0, %v989
  %v991 = vpop.f32.mrf.mxu0
  %992 = vdwg.mxu0
  %v994 = vsel %vm165, %v912, 0
  %v997 = vsel %vm165, %v913, 0
  %v1000 = vsel %vm165, %v914, 0
  %v1003 = vsel %vm165, %v915, 0
  %1005 = vmatprep.subr.bf16.mxu0 0
  %1006 = vmatpush1.bf16.msra.mxu0 0
  %1007 = vmatprep.subr.bf16.mxu0 0
  %1008 = vmatpush1.bf16.msra.mxu0 0
  %1009 = vmatprep.subr.bf16.mxu0 0
  %1010 = vmatpush1.bf16.msra.mxu0 0
  %1011 = vmatprep.subr.bf16.mxu0 0
  %1012 = vmatpush1.bf16.msra.mxu0 0
  %1013 = vmatprep.subr.bf16.mxu0 0
  %1014 = vmatpush1.bf16.msra.mxu0 %v552
  %1015 = vmatprep.subr.bf16.mxu0 0
  %1016 = vmatpush1.bf16.msra.mxu0 %v551
  %1017 = vmatprep.subr.bf16.mxu0 0
  %1018 = vmatpush1.bf16.msra.mxu0 %v550
  %1019 = vmatprep.subr.bf16.mxu0 0
  %1020 = vmatpush1.bf16.msra.mxu0 %v549
  %1021 = vmatprep.subr.bf16.mxu0 0
  %1022 = vmatpush2.bf16.msra.mxu0 0
  %1023 = vmatprep.subr.bf16.mxu0 0
  %1024 = vmatpush2.bf16.msra.mxu0 0
  %1025 = vmatprep.subr.bf16.mxu0 0
  %1026 = vmatpush2.bf16.msra.mxu0 0
  %1027 = vmatprep.subr.bf16.mxu0 0
  %1028 = vmatpush2.bf16.msra.mxu0 0
  %1029 = vmatprep.subr.bf16.mxu0 0
  %1030 = vmatpush2.bf16.msra.mxu0 0
  %1031 = vmatprep.subr.bf16.mxu0 0
  %1032 = vmatpush2.bf16.msra.mxu0 0
  %1033 = vmatprep.subr.bf16.mxu0 0
  %1034 = vmatpush2.bf16.msra.mxu0 0
  %1035 = vmatprep.subr.bf16.mxu0 0
  %1036 = vmatpush2.bf16.msra.mxu0 0
  %1037 = vmatprep.mubr.bf16.mxu0 0
  %1038 = vmatmul.mubr.bf16.gmra.mxu0 %v994
  %v1039 = vpop.f32.mrf.mxu0
  %v1040 = vadd.f32 0.0, %v1039
  %v1041 = vpop.f32.mrf.mxu0
  %v1042 = vpop.f32.mrf.mxu0
  %v1043 = vadd.f32 0.0, %v1042
  %v1044 = vpop.f32.mrf.mxu0
  %1045 = vmatprep.mubr.bf16.mxu0 0
  %1046 = vmatmul.mubr.bf16.gmra.mxu0 %v997
  %v1047 = vpop.f32.mrf.mxu0
  %v1048 = vadd.f32 0.0, %v1047
  %v1049 = vpop.f32.mrf.mxu0
  %v1050 = vpop.f32.mrf.mxu0
  %v1051 = vadd.f32 0.0, %v1050
  %v1052 = vpop.f32.mrf.mxu0
  %1053 = vmatprep.mubr.bf16.mxu0 0
  %1054 = vmatmul.mubr.bf16.gmra.mxu0 %v1000
  %v1055 = vpop.f32.mrf.mxu0
  %v1056 = vadd.f32 0.0, %v1055
  %v1057 = vpop.f32.mrf.mxu0
  %v1058 = vpop.f32.mrf.mxu0
  %v1059 = vadd.f32 0.0, %v1058
  %v1060 = vpop.f32.mrf.mxu0
  %1061 = vmatprep.mubr.bf16.mxu0 0
  %1062 = vmatmul.mubr.bf16.gmra.mxu0 %v1003
  %v1063 = vpop.f32.mrf.mxu0
  %v1064 = vadd.f32 0.0, %v1063
  %v1065 = vpop.f32.mrf.mxu0
  %v1066 = vpop.f32.mrf.mxu0
  %v1067 = vadd.f32 0.0, %v1066
  %v1068 = vpop.f32.mrf.mxu0
  %1069 = vdwg.mxu0
  %v1070 = vpack.c.bf16 %v966, %v963
  %v1071 = vpack.c.bf16 %v974, %v971
  %v1072 = vpack.c.bf16 %v982, %v979
  %v1073 = vpack.c.bf16 %v990, %v987
  %v1074 = vpack.c.bf16 %v1043, %v1040
  %v1075 = vpack.c.bf16 %v1051, %v1048
  %v1076 = vpack.c.bf16 %v1059, %v1056
  %v1077 = vpack.c.bf16 %v1067, %v1064
  %s1078 = scalar_lea.vmem %s1, 32
  %v1079 = vld [vmem:[%s1078] sm:$0xf]
  %v1080 = vld [vmem:[%s1078 + $0x4] sm:$0xf]
  %v1081 = vld [vmem:[%s1078 + $0x8] sm:$0xf]
  %v1082 = vld [vmem:[%s1078 + $0xc] sm:$0xf]
  %v1083 = vld [vmem:[%s1078 + $0x10] sm:$0xf]
  %v1084 = vld [vmem:[%s1078 + $0x14] sm:$0xf]
  %v1085 = vld [vmem:[%s1078 + $0x18] sm:$0xf]
  %v1086 = vld [vmem:[%s1078 + $0x1c] sm:$0xf]
  %s1087 = scalar_lea.vmem %s2, 32
  %v1088 = vld [vmem:[%s1087] sm:$0xf]
  %v1089 = vld [vmem:[%s1087 + $0x4] sm:$0xf]
  %v1090 = vld [vmem:[%s1087 + $0x8] sm:$0xf]
  %v1091 = vld [vmem:[%s1087 + $0xc] sm:$0xf]
  %v1092 = vld [vmem:[%s1087 + $0x10] sm:$0xf]
  %v1093 = vld [vmem:[%s1087 + $0x14] sm:$0xf]
  %v1094 = vld [vmem:[%s1087 + $0x18] sm:$0xf]
  %v1095 = vld [vmem:[%s1087 + $0x1c] sm:$0xf]
  %s1096 = scalar_lea.vmem %s3, 32
  %v1097 = vld [vmem:[%s1096] sm:$0xf]
  %v1098 = vld [vmem:[%s1096 + $0x4] sm:$0xf]
  %v1099 = vld [vmem:[%s1096 + $0x8] sm:$0xf]
  %v1100 = vld [vmem:[%s1096 + $0xc] sm:$0xf]
  %v1101 = vld [vmem:[%s1096 + $0x10] sm:$0xf]
  %v1102 = vld [vmem:[%s1096 + $0x14] sm:$0xf]
  %v1103 = vld [vmem:[%s1096 + $0x18] sm:$0xf]
  %v1104 = vld [vmem:[%s1096 + $0x1c] sm:$0xf]
  %s1105 = scalar_lea.vmem %s4, 16
  %v1106 = vld [vmem:[%s1105] sm:$0xf]
  %v1107 = vld [vmem:[%s1105 + $0x4] sm:$0xf]
  %v1108 = vld [vmem:[%s1105 + $0x8] sm:$0xf]
  %v1109 = vld [vmem:[%s1105 + $0xc] sm:$0xf]
  %v1118 = vunpack.c.l.b16 %v1079
  %v1119 = vunpack.c.l.b16 %v1080
  %v1120 = vunpack.c.l.b16 %v1081
  %v1121 = vunpack.c.l.b16 %v1082
  %v1122 = vunpack.c.l.b16 %v1083
  %v1123 = vunpack.c.l.b16 %v1084
  %v1124 = vunpack.c.l.b16 %v1085
  %v1125 = vunpack.c.l.b16 %v1086
  %v1126 = vpack.c.b16 %v1119, %v1118
  %v1127 = vpack.c.b16 %v1121, %v1120
  %v1128 = vpack.c.b16 %v1123, %v1122
  %v1129 = vpack.c.b16 %v1125, %v1124
  %1134 = vmatprep.subr.bf16.mxu0 0
  %1135 = vmatpush1.bf16.msra.mxu0 0
  %1136 = vmatprep.subr.bf16.mxu0 0
  %1137 = vmatpush1.bf16.msra.mxu0 0
  %1138 = vmatprep.subr.bf16.mxu0 0
  %1139 = vmatpush1.bf16.msra.mxu0 0
  %1140 = vmatprep.subr.bf16.mxu0 0
  %1141 = vmatpush1.bf16.msra.mxu0 0
  %1142 = vmatprep.subr.bf16.mxu0 0
  %1143 = vmatpush1.bf16.msra.mxu0 %v1129
  %1144 = vmatprep.subr.bf16.mxu0 0
  %1145 = vmatpush1.bf16.msra.mxu0 %v1128
  %1146 = vmatprep.subr.bf16.mxu0 0
  %1147 = vmatpush1.bf16.msra.mxu0 %v1127
  %1148 = vmatprep.subr.bf16.mxu0 0
  %1149 = vmatpush1.bf16.msra.mxu0 %v1126
  %1150 = vmatprep.subr.bf16.mxu0 0
  %1151 = vmatpush2.bf16.msra.mxu0 0
  %1152 = vmatprep.subr.bf16.mxu0 0
  %1153 = vmatpush2.bf16.msra.mxu0 0
  %1154 = vmatprep.subr.bf16.mxu0 0
  %1155 = vmatpush2.bf16.msra.mxu0 0
  %1156 = vmatprep.subr.bf16.mxu0 0
  %1157 = vmatpush2.bf16.msra.mxu0 0
  %1158 = vmatprep.subr.bf16.mxu0 0
  %1159 = vmatpush2.bf16.msra.mxu0 0
  %1160 = vmatprep.subr.bf16.mxu0 0
  %1161 = vmatpush2.bf16.msra.mxu0 0
  %1162 = vmatprep.subr.bf16.mxu0 0
  %1163 = vmatpush2.bf16.msra.mxu0 0
  %1164 = vmatprep.subr.bf16.mxu0 0
  %1165 = vmatpush2.bf16.msra.mxu0 0
  %1166 = vmatprep.mubr.bf16.mxu0 0
  %1167 = vmatmul.mubr.bf16.gmra.mxu0 %v167
  %v1168 = vpop.f32.mrf.mxu0
  %v1169 = vadd.f32 0.0, %v1168
  %v1170 = vpop.f32.mrf.mxu0
  %v1171 = vpop.f32.mrf.mxu0
  %v1172 = vadd.f32 0.0, %v1171
  %v1173 = vpop.f32.mrf.mxu0
  %1174 = vmatprep.mubr.bf16.mxu0 0
  %1175 = vmatmul.mubr.bf16.gmra.mxu0 %v170
  %v1176 = vpop.f32.mrf.mxu0
  %v1177 = vadd.f32 0.0, %v1176
  %v1178 = vpop.f32.mrf.mxu0
  %v1179 = vpop.f32.mrf.mxu0
  %v1180 = vadd.f32 0.0, %v1179
  %v1181 = vpop.f32.mrf.mxu0
  %1182 = vmatprep.mubr.bf16.mxu0 0
  %1183 = vmatmul.mubr.bf16.gmra.mxu0 %v173
  %v1184 = vpop.f32.mrf.mxu0
  %v1185 = vadd.f32 0.0, %v1184
  %v1186 = vpop.f32.mrf.mxu0
  %v1187 = vpop.f32.mrf.mxu0
  %v1188 = vadd.f32 0.0, %v1187
  %v1189 = vpop.f32.mrf.mxu0
  %1190 = vmatprep.mubr.bf16.mxu0 0
  %1191 = vmatmul.mubr.bf16.gmra.mxu0 %v176
  %v1192 = vpop.f32.mrf.mxu0
  %v1193 = vadd.f32 0.0, %v1192
  %v1194 = vpop.f32.mrf.mxu0
  %v1195 = vpop.f32.mrf.mxu0
  %v1196 = vadd.f32 0.0, %v1195
  %v1197 = vpop.f32.mrf.mxu0
  %1198 = vmatprep.mubr.bf16.mxu0 0
  %1199 = vmatmul.mubr.bf16.gmra.mxu0 %v179
  %v1200 = vpop.f32.mrf.mxu0
  %v1201 = vadd.f32 0.0, %v1200
  %v1202 = vpop.f32.mrf.mxu0
  %v1203 = vpop.f32.mrf.mxu0
  %v1204 = vadd.f32 0.0, %v1203
  %v1205 = vpop.f32.mrf.mxu0
  %1206 = vmatprep.mubr.bf16.mxu0 0
  %1207 = vmatmul.mubr.bf16.gmra.mxu0 %v182
  %v1208 = vpop.f32.mrf.mxu0
  %v1209 = vadd.f32 0.0, %v1208
  %v1210 = vpop.f32.mrf.mxu0
  %v1211 = vpop.f32.mrf.mxu0
  %v1212 = vadd.f32 0.0, %v1211
  %v1213 = vpop.f32.mrf.mxu0
  %1214 = vmatprep.mubr.bf16.mxu0 0
  %1215 = vmatmul.mubr.bf16.gmra.mxu0 %v185
  %v1216 = vpop.f32.mrf.mxu0
  %v1217 = vadd.f32 0.0, %v1216
  %v1218 = vpop.f32.mrf.mxu0
  %v1219 = vpop.f32.mrf.mxu0
  %v1220 = vadd.f32 0.0, %v1219
  %v1221 = vpop.f32.mrf.mxu0
  %1222 = vmatprep.mubr.bf16.mxu0 0
  %1223 = vmatmul.mubr.bf16.gmra.mxu0 %v188
  %v1224 = vpop.f32.mrf.mxu0
  %v1225 = vadd.f32 0.0, %v1224
  %v1226 = vpop.f32.mrf.mxu0
  %v1227 = vpop.f32.mrf.mxu0
  %v1228 = vadd.f32 0.0, %v1227
  %v1229 = vpop.f32.mrf.mxu0
  %1230 = vdwg.mxu0
  %v1239 = vunpack.c.l.b16 %v1088
  %v1240 = vunpack.c.l.b16 %v1089
  %v1241 = vunpack.c.l.b16 %v1090
  %v1242 = vunpack.c.l.b16 %v1091
  %v1243 = vunpack.c.l.b16 %v1092
  %v1244 = vunpack.c.l.b16 %v1093
  %v1245 = vunpack.c.l.b16 %v1094
  %v1246 = vunpack.c.l.b16 %v1095
  %v1247 = vpack.c.b16 %v1240, %v1239
  %v1248 = vpack.c.b16 %v1242, %v1241
  %v1249 = vpack.c.b16 %v1244, %v1243
  %v1250 = vpack.c.b16 %v1246, %v1245
  %1255 = vmatprep.subr.bf16.mxu0 0
  %1256 = vmatpush1.bf16.msra.mxu0 0
  %1257 = vmatprep.subr.bf16.mxu0 0
  %1258 = vmatpush1.bf16.msra.mxu0 0
  %1259 = vmatprep.subr.bf16.mxu0 0
  %1260 = vmatpush1.bf16.msra.mxu0 0
  %1261 = vmatprep.subr.bf16.mxu0 0
  %1262 = vmatpush1.bf16.msra.mxu0 0
  %1263 = vmatprep.subr.bf16.mxu0 0
  %1264 = vmatpush1.bf16.msra.mxu0 %v1250
  %1265 = vmatprep.subr.bf16.mxu0 0
  %1266 = vmatpush1.bf16.msra.mxu0 %v1249
  %1267 = vmatprep.subr.bf16.mxu0 0
  %1268 = vmatpush1.bf16.msra.mxu0 %v1248
  %1269 = vmatprep.subr.bf16.mxu0 0
  %1270 = vmatpush1.bf16.msra.mxu0 %v1247
  %1271 = vmatprep.subr.bf16.mxu0 0
  %1272 = vmatpush2.bf16.msra.mxu0 0
  %1273 = vmatprep.subr.bf16.mxu0 0
  %1274 = vmatpush2.bf16.msra.mxu0 0
  %1275 = vmatprep.subr.bf16.mxu0 0
  %1276 = vmatpush2.bf16.msra.mxu0 0
  %1277 = vmatprep.subr.bf16.mxu0 0
  %1278 = vmatpush2.bf16.msra.mxu0 0
  %1279 = vmatprep.subr.bf16.mxu0 0
  %1280 = vmatpush2.bf16.msra.mxu0 0
  %1281 = vmatprep.subr.bf16.mxu0 0
  %1282 = vmatpush2.bf16.msra.mxu0 0
  %1283 = vmatprep.subr.bf16.mxu0 0
  %1284 = vmatpush2.bf16.msra.mxu0 0
  %1285 = vmatprep.subr.bf16.mxu0 0
  %1286 = vmatpush2.bf16.msra.mxu0 0
  %1287 = vmatprep.mubr.bf16.mxu0 0
  %1288 = vmatmul.mubr.bf16.gmra.mxu0 %v167
  %v1289 = vpop.f32.mrf.mxu0
  %v1290 = vadd.f32 0.0, %v1289
  %v1291 = vpop.f32.mrf.mxu0
  %v1292 = vpop.f32.mrf.mxu0
  %v1293 = vadd.f32 0.0, %v1292
  %v1294 = vpop.f32.mrf.mxu0
  %1295 = vmatprep.mubr.bf16.mxu0 0
  %1296 = vmatmul.mubr.bf16.gmra.mxu0 %v170
  %v1297 = vpop.f32.mrf.mxu0
  %v1298 = vadd.f32 0.0, %v1297
  %v1299 = vpop.f32.mrf.mxu0
  %v1300 = vpop.f32.mrf.mxu0
  %v1301 = vadd.f32 0.0, %v1300
  %v1302 = vpop.f32.mrf.mxu0
  %1303 = vmatprep.mubr.bf16.mxu0 0
  %1304 = vmatmul.mubr.bf16.gmra.mxu0 %v173
  %v1305 = vpop.f32.mrf.mxu0
  %v1306 = vadd.f32 0.0, %v1305
  %v1307 = vpop.f32.mrf.mxu0
  %v1308 = vpop.f32.mrf.mxu0
  %v1309 = vadd.f32 0.0, %v1308
  %v1310 = vpop.f32.mrf.mxu0
  %1311 = vmatprep.mubr.bf16.mxu0 0
  %1312 = vmatmul.mubr.bf16.gmra.mxu0 %v176
  %v1313 = vpop.f32.mrf.mxu0
  %v1314 = vadd.f32 0.0, %v1313
  %v1315 = vpop.f32.mrf.mxu0
  %v1316 = vpop.f32.mrf.mxu0
  %v1317 = vadd.f32 0.0, %v1316
  %v1318 = vpop.f32.mrf.mxu0
  %1319 = vmatprep.mubr.bf16.mxu0 0
  %1320 = vmatmul.mubr.bf16.gmra.mxu0 %v179
  %v1321 = vpop.f32.mrf.mxu0
  %v1322 = vadd.f32 0.0, %v1321
  %v1323 = vpop.f32.mrf.mxu0
  %v1324 = vpop.f32.mrf.mxu0
  %v1325 = vadd.f32 0.0, %v1324
  %v1326 = vpop.f32.mrf.mxu0
  %1327 = vmatprep.mubr.bf16.mxu0 0
  %1328 = vmatmul.mubr.bf16.gmra.mxu0 %v182
  %v1329 = vpop.f32.mrf.mxu0
  %v1330 = vadd.f32 0.0, %v1329
  %v1331 = vpop.f32.mrf.mxu0
  %v1332 = vpop.f32.mrf.mxu0
  %v1333 = vadd.f32 0.0, %v1332
  %v1334 = vpop.f32.mrf.mxu0
  %1335 = vmatprep.mubr.bf16.mxu0 0
  %1336 = vmatmul.mubr.bf16.gmra.mxu0 %v185
  %v1337 = vpop.f32.mrf.mxu0
  %v1338 = vadd.f32 0.0, %v1337
  %v1339 = vpop.f32.mrf.mxu0
  %v1340 = vpop.f32.mrf.mxu0
  %v1341 = vadd.f32 0.0, %v1340
  %v1342 = vpop.f32.mrf.mxu0
  %1343 = vmatprep.mubr.bf16.mxu0 0
  %1344 = vmatmul.mubr.bf16.gmra.mxu0 %v188
  %v1345 = vpop.f32.mrf.mxu0
  %v1346 = vadd.f32 0.0, %v1345
  %v1347 = vpop.f32.mrf.mxu0
  %v1348 = vpop.f32.mrf.mxu0
  %v1349 = vadd.f32 0.0, %v1348
  %v1350 = vpop.f32.mrf.mxu0
  %1351 = vdwg.mxu0
  %v1360 = vunpack.c.l.b16 %v1097
  %v1361 = vunpack.c.l.b16 %v1098
  %v1362 = vunpack.c.l.b16 %v1099
  %v1363 = vunpack.c.l.b16 %v1100
  %v1364 = vunpack.c.l.b16 %v1101
  %v1365 = vunpack.c.l.b16 %v1102
  %v1366 = vunpack.c.l.b16 %v1103
  %v1367 = vunpack.c.l.b16 %v1104
  %v1368 = vpack.c.b16 %v1361, %v1360
  %v1369 = vpack.c.b16 %v1363, %v1362
  %v1370 = vpack.c.b16 %v1365, %v1364
  %v1371 = vpack.c.b16 %v1367, %v1366
  %1376 = vmatprep.subr.bf16.mxu0 0
  %1377 = vmatpush1.bf16.msra.mxu0 0
  %1378 = vmatprep.subr.bf16.mxu0 0
  %1379 = vmatpush1.bf16.msra.mxu0 0
  %1380 = vmatprep.subr.bf16.mxu0 0
  %1381 = vmatpush1.bf16.msra.mxu0 0
  %1382 = vmatprep.subr.bf16.mxu0 0
  %1383 = vmatpush1.bf16.msra.mxu0 0
  %1384 = vmatprep.subr.bf16.mxu0 0
  %1385 = vmatpush1.bf16.msra.mxu0 %v1371
  %1386 = vmatprep.subr.bf16.mxu0 0
  %1387 = vmatpush1.bf16.msra.mxu0 %v1370
  %1388 = vmatprep.subr.bf16.mxu0 0
  %1389 = vmatpush1.bf16.msra.mxu0 %v1369
  %1390 = vmatprep.subr.bf16.mxu0 0
  %1391 = vmatpush1.bf16.msra.mxu0 %v1368
  %1392 = vmatprep.subr.bf16.mxu0 0
  %1393 = vmatpush2.bf16.msra.mxu0 0
  %1394 = vmatprep.subr.bf16.mxu0 0
  %1395 = vmatpush2.bf16.msra.mxu0 0
  %1396 = vmatprep.subr.bf16.mxu0 0
  %1397 = vmatpush2.bf16.msra.mxu0 0
  %1398 = vmatprep.subr.bf16.mxu0 0
  %1399 = vmatpush2.bf16.msra.mxu0 0
  %1400 = vmatprep.subr.bf16.mxu0 0
  %1401 = vmatpush2.bf16.msra.mxu0 0
  %1402 = vmatprep.subr.bf16.mxu0 0
  %1403 = vmatpush2.bf16.msra.mxu0 0
  %1404 = vmatprep.subr.bf16.mxu0 0
  %1405 = vmatpush2.bf16.msra.mxu0 0
  %1406 = vmatprep.subr.bf16.mxu0 0
  %1407 = vmatpush2.bf16.msra.mxu0 0
  %1408 = vmatprep.mubr.bf16.mxu0 0
  %1409 = vmatmul.mubr.bf16.gmra.mxu0 %v167
  %v1410 = vpop.f32.mrf.mxu0
  %v1411 = vadd.f32 0.0, %v1410
  %v1412 = vpop.f32.mrf.mxu0
  %v1413 = vpop.f32.mrf.mxu0
  %v1414 = vadd.f32 0.0, %v1413
  %v1415 = vpop.f32.mrf.mxu0
  %1416 = vmatprep.mubr.bf16.mxu0 0
  %1417 = vmatmul.mubr.bf16.gmra.mxu0 %v170
  %v1418 = vpop.f32.mrf.mxu0
  %v1419 = vadd.f32 0.0, %v1418
  %v1420 = vpop.f32.mrf.mxu0
  %v1421 = vpop.f32.mrf.mxu0
  %v1422 = vadd.f32 0.0, %v1421
  %v1423 = vpop.f32.mrf.mxu0
  %1424 = vmatprep.mubr.bf16.mxu0 0
  %1425 = vmatmul.mubr.bf16.gmra.mxu0 %v173
  %v1426 = vpop.f32.mrf.mxu0
  %v1427 = vadd.f32 0.0, %v1426
  %v1428 = vpop.f32.mrf.mxu0
  %v1429 = vpop.f32.mrf.mxu0
  %v1430 = vadd.f32 0.0, %v1429
  %v1431 = vpop.f32.mrf.mxu0
  %1432 = vmatprep.mubr.bf16.mxu0 0
  %1433 = vmatmul.mubr.bf16.gmra.mxu0 %v176
  %v1434 = vpop.f32.mrf.mxu0
  %v1435 = vadd.f32 0.0, %v1434
  %v1436 = vpop.f32.mrf.mxu0
  %v1437 = vpop.f32.mrf.mxu0
  %v1438 = vadd.f32 0.0, %v1437
  %v1439 = vpop.f32.mrf.mxu0
  %1440 = vmatprep.mubr.bf16.mxu0 0
  %1441 = vmatmul.mubr.bf16.gmra.mxu0 %v179
  %v1442 = vpop.f32.mrf.mxu0
  %v1443 = vadd.f32 0.0, %v1442
  %v1444 = vpop.f32.mrf.mxu0
  %v1445 = vpop.f32.mrf.mxu0
  %v1446 = vadd.f32 0.0, %v1445
  %v1447 = vpop.f32.mrf.mxu0
  %1448 = vmatprep.mubr.bf16.mxu0 0
  %1449 = vmatmul.mubr.bf16.gmra.mxu0 %v182
  %v1450 = vpop.f32.mrf.mxu0
  %v1451 = vadd.f32 0.0, %v1450
  %v1452 = vpop.f32.mrf.mxu0
  %v1453 = vpop.f32.mrf.mxu0
  %v1454 = vadd.f32 0.0, %v1453
  %v1455 = vpop.f32.mrf.mxu0
  %1456 = vmatprep.mubr.bf16.mxu0 0
  %1457 = vmatmul.mubr.bf16.gmra.mxu0 %v185
  %v1458 = vpop.f32.mrf.mxu0
  %v1459 = vadd.f32 0.0, %v1458
  %v1460 = vpop.f32.mrf.mxu0
  %v1461 = vpop.f32.mrf.mxu0
  %v1462 = vadd.f32 0.0, %v1461
  %v1463 = vpop.f32.mrf.mxu0
  %1464 = vmatprep.mubr.bf16.mxu0 0
  %1465 = vmatmul.mubr.bf16.gmra.mxu0 %v188
  %v1466 = vpop.f32.mrf.mxu0
  %v1467 = vadd.f32 0.0, %v1466
  %v1468 = vpop.f32.mrf.mxu0
  %v1469 = vpop.f32.mrf.mxu0
  %v1470 = vadd.f32 0.0, %v1469
  %v1471 = vpop.f32.mrf.mxu0
  %1472 = vdwg.mxu0
  %v1473 = vpack.c.bf16 %v1172, %v1169
  %v1474 = vpack.c.bf16 %v1180, %v1177
  %v1475 = vpack.c.bf16 %v1188, %v1185
  %v1476 = vpack.c.bf16 %v1196, %v1193
  %v1477 = vpack.c.bf16 %v1204, %v1201
  %v1478 = vpack.c.bf16 %v1212, %v1209
  %v1479 = vpack.c.bf16 %v1220, %v1217
  %v1480 = vpack.c.bf16 %v1228, %v1225
  %v1481 = vpack.c.bf16 %v1293, %v1290
  %v1482 = vpack.c.bf16 %v1301, %v1298
  %v1483 = vpack.c.bf16 %v1309, %v1306
  %v1484 = vpack.c.bf16 %v1317, %v1314
  %v1485 = vpack.c.bf16 %v1325, %v1322
  %v1486 = vpack.c.bf16 %v1333, %v1330
  %v1487 = vpack.c.bf16 %v1341, %v1338
  %v1488 = vpack.c.bf16 %v1349, %v1346
  %v1489 = vpack.c.bf16 %v1414, %v1411
  %v1490 = vpack.c.bf16 %v1422, %v1419
  %v1491 = vpack.c.bf16 %v1430, %v1427
  %v1492 = vpack.c.bf16 %v1438, %v1435
  %v1493 = vpack.c.bf16 %v1446, %v1443
  %v1494 = vpack.c.bf16 %v1454, %v1451
  %v1495 = vpack.c.bf16 %v1462, %v1459
  %v1496 = vpack.c.bf16 %v1470, %v1467
  %v1498 = vsel %vm553, %v1473, 0
  %v1501 = vsel %vm553, %v1474, 0
  %v1504 = vsel %vm553, %v1475, 0
  %v1507 = vsel %vm553, %v1476, 0
  %v1510 = vsel %vm553, %v1481, 0
  %v1513 = vsel %vm553, %v1482, 0
  %v1516 = vsel %vm553, %v1483, 0
  %v1519 = vsel %vm553, %v1484, 0
  %1521 = vmatprep.subr.bf16.mxu0 0
  %1522 = vmatpush1.bf16.xpose.msra.mxu0 0
  %1523 = vmatprep.subr.bf16.mxu0 0
  %1524 = vmatpush1.bf16.xpose.msra.mxu0 0
  %1525 = vmatprep.subr.bf16.mxu0 0
  %1526 = vmatpush1.bf16.xpose.msra.mxu0 0
  %1527 = vmatprep.subr.bf16.mxu0 0
  %1528 = vmatpush1.bf16.xpose.msra.mxu0 0
  %1529 = vmatprep.subr.bf16.mxu0 0
  %1530 = vmatpush1.bf16.xpose.msra.mxu0 %v1519
  %1531 = vmatprep.subr.bf16.mxu0 0
  %1532 = vmatpush1.bf16.xpose.msra.mxu0 %v1516
  %1533 = vmatprep.subr.bf16.mxu0 0
  %1534 = vmatpush1.bf16.xpose.msra.mxu0 %v1513
  %1535 = vmatprep.subr.bf16.mxu0 0
  %1536 = vmatpush1.bf16.xpose.msra.mxu0 %v1510
  %1537 = vmatprep.subr.bf16.mxu0 0
  %1538 = vmatpush2.bf16.xpose.msra.mxu0 0
  %1539 = vmatprep.subr.bf16.mxu0 0
  %1540 = vmatpush2.bf16.xpose.msra.mxu0 0
  %1541 = vmatprep.subr.bf16.mxu0 0
  %1542 = vmatpush2.bf16.xpose.msra.mxu0 0
  %1543 = vmatprep.subr.bf16.mxu0 0
  %1544 = vmatpush2.bf16.xpose.msra.mxu0 0
  %1545 = vmatprep.subr.bf16.mxu0 0
  %1546 = vmatpush2.bf16.xpose.msra.mxu0 0
  %1547 = vmatprep.subr.bf16.mxu0 0
  %1548 = vmatpush2.bf16.xpose.msra.mxu0 0
  %1549 = vmatprep.subr.bf16.mxu0 0
  %1550 = vmatpush2.bf16.xpose.msra.mxu0 0
  %1551 = vmatprep.subr.bf16.mxu0 0
  %1552 = vmatpush2.bf16.xpose.msra.mxu0 0
  %1553 = vmatprep.mubr.bf16.mxu0 0
  %1554 = vmatmul.mubr.bf16.gmra.mxu0 %v1498
  %v1555 = vpop.f32.mrf.mxu0
  %v1556 = vadd.f32 0.0, %v1555
  %v1557 = vpop.f32.mrf.mxu0
  %v1558 = vpop.f32.mrf.mxu0
  %v1559 = vadd.f32 0.0, %v1558
  %v1560 = vpop.f32.mrf.mxu0
  %1561 = vmatprep.mubr.bf16.mxu0 0
  %1562 = vmatmul.mubr.bf16.gmra.mxu0 %v1501
  %v1563 = vpop.f32.mrf.mxu0
  %v1564 = vadd.f32 0.0, %v1563
  %v1565 = vpop.f32.mrf.mxu0
  %v1566 = vpop.f32.mrf.mxu0
  %v1567 = vadd.f32 0.0, %v1566
  %v1568 = vpop.f32.mrf.mxu0
  %1569 = vmatprep.mubr.bf16.mxu0 0
  %1570 = vmatmul.mubr.bf16.gmra.mxu0 %v1504
  %v1571 = vpop.f32.mrf.mxu0
  %v1572 = vadd.f32 0.0, %v1571
  %v1573 = vpop.f32.mrf.mxu0
  %v1574 = vpop.f32.mrf.mxu0
  %v1575 = vadd.f32 0.0, %v1574
  %v1576 = vpop.f32.mrf.mxu0
  %1577 = vmatprep.mubr.bf16.mxu0 0
  %1578 = vmatmul.mubr.bf16.gmra.mxu0 %v1507
  %v1579 = vpop.f32.mrf.mxu0
  %v1580 = vadd.f32 0.0, %v1579
  %v1581 = vpop.f32.mrf.mxu0
  %v1582 = vpop.f32.mrf.mxu0
  %v1583 = vadd.f32 0.0, %v1582
  %v1584 = vpop.f32.mrf.mxu0
  %1585 = vdwg.mxu0
  %v1587 = vsel %vm553, %v1477, 0
  %v1590 = vsel %vm553, %v1478, 0
  %v1593 = vsel %vm553, %v1479, 0
  %v1596 = vsel %vm553, %v1480, 0
  %v1599 = vsel %vm553, %v1485, 0
  %v1602 = vsel %vm553, %v1486, 0
  %v1605 = vsel %vm553, %v1487, 0
  %v1608 = vsel %vm553, %v1488, 0
  %1610 = vmatprep.subr.bf16.mxu0 0
  %1611 = vmatpush1.bf16.xpose.msra.mxu0 0
  %1612 = vmatprep.subr.bf16.mxu0 0
  %1613 = vmatpush1.bf16.xpose.msra.mxu0 0
  %1614 = vmatprep.subr.bf16.mxu0 0
  %1615 = vmatpush1.bf16.xpose.msra.mxu0 0
  %1616 = vmatprep.subr.bf16.mxu0 0
  %1617 = vmatpush1.bf16.xpose.msra.mxu0 0
  %1618 = vmatprep.subr.bf16.mxu0 0
  %1619 = vmatpush1.bf16.xpose.msra.mxu0 %v1608
  %1620 = vmatprep.subr.bf16.mxu0 0
  %1621 = vmatpush1.bf16.xpose.msra.mxu0 %v1605
  %1622 = vmatprep.subr.bf16.mxu0 0
  %1623 = vmatpush1.bf16.xpose.msra.mxu0 %v1602
  %1624 = vmatprep.subr.bf16.mxu0 0
  %1625 = vmatpush1.bf16.xpose.msra.mxu0 %v1599
  %1626 = vmatprep.subr.bf16.mxu0 0
  %1627 = vmatpush2.bf16.xpose.msra.mxu0 0
  %1628 = vmatprep.subr.bf16.mxu0 0
  %1629 = vmatpush2.bf16.xpose.msra.mxu0 0
  %1630 = vmatprep.subr.bf16.mxu0 0
  %1631 = vmatpush2.bf16.xpose.msra.mxu0 0
  %1632 = vmatprep.subr.bf16.mxu0 0
  %1633 = vmatpush2.bf16.xpose.msra.mxu0 0
  %1634 = vmatprep.subr.bf16.mxu0 0
  %1635 = vmatpush2.bf16.xpose.msra.mxu0 0
  %1636 = vmatprep.subr.bf16.mxu0 0
  %1637 = vmatpush2.bf16.xpose.msra.mxu0 0
  %1638 = vmatprep.subr.bf16.mxu0 0
  %1639 = vmatpush2.bf16.xpose.msra.mxu0 0
  %1640 = vmatprep.subr.bf16.mxu0 0
  %1641 = vmatpush2.bf16.xpose.msra.mxu0 0
  %1642 = vmatprep.mubr.bf16.mxu0 0
  %1643 = vmatmul.mubr.bf16.gmra.mxu0 %v1587
  %v1644 = vpop.f32.mrf.mxu0
  %v1645 = vadd.f32 0.0, %v1644
  %v1646 = vpop.f32.mrf.mxu0
  %v1647 = vpop.f32.mrf.mxu0
  %v1648 = vadd.f32 0.0, %v1647
  %v1649 = vpop.f32.mrf.mxu0
  %1650 = vmatprep.mubr.bf16.mxu0 0
  %1651 = vmatmul.mubr.bf16.gmra.mxu0 %v1590
  %v1652 = vpop.f32.mrf.mxu0
  %v1653 = vadd.f32 0.0, %v1652
  %v1654 = vpop.f32.mrf.mxu0
  %v1655 = vpop.f32.mrf.mxu0
  %v1656 = vadd.f32 0.0, %v1655
  %v1657 = vpop.f32.mrf.mxu0
  %1658 = vmatprep.mubr.bf16.mxu0 0
  %1659 = vmatmul.mubr.bf16.gmra.mxu0 %v1593
  %v1660 = vpop.f32.mrf.mxu0
  %v1661 = vadd.f32 0.0, %v1660
  %v1662 = vpop.f32.mrf.mxu0
  %v1663 = vpop.f32.mrf.mxu0
  %v1664 = vadd.f32 0.0, %v1663
  %v1665 = vpop.f32.mrf.mxu0
  %1666 = vmatprep.mubr.bf16.mxu0 0
  %1667 = vmatmul.mubr.bf16.gmra.mxu0 %v1596
  %v1668 = vpop.f32.mrf.mxu0
  %v1669 = vadd.f32 0.0, %v1668
  %v1670 = vpop.f32.mrf.mxu0
  %v1671 = vpop.f32.mrf.mxu0
  %v1672 = vadd.f32 0.0, %v1671
  %v1673 = vpop.f32.mrf.mxu0
  %1674 = vdwg.mxu0
  %v1675 = vsel %vm165, %v1556, -inf
  %1676 = vmax.xlane.f32.xlu0 %v1675
  %v1677 = vpop.xlane.xlu0 %1676
  %v1678 = vsel %vm165, %v1559, -inf
  %1679 = vmax.xlane.f32.xlu0 %v1678
  %v1680 = vpop.xlane.xlu0 %1679
  %v1681 = vsel %vm165, %v1564, -inf
  %1682 = vmax.xlane.f32.xlu0 %v1681
  %v1683 = vpop.xlane.xlu0 %1682
  %v1684 = vsel %vm165, %v1567, -inf
  %1685 = vmax.xlane.f32.xlu0 %v1684
  %v1686 = vpop.xlane.xlu0 %1685
  %v1687 = vsel %vm165, %v1572, -inf
  %1688 = vmax.xlane.f32.xlu0 %v1687
  %v1689 = vpop.xlane.xlu0 %1688
  %v1690 = vsel %vm165, %v1575, -inf
  %1691 = vmax.xlane.f32.xlu0 %v1690
  %v1692 = vpop.xlane.xlu0 %1691
  %v1693 = vsel %vm165, %v1580, -inf
  %1694 = vmax.xlane.f32.xlu0 %v1693
  %v1695 = vpop.xlane.xlu0 %1694
  %v1696 = vsel %vm165, %v1583, -inf
  %1697 = vmax.xlane.f32.xlu0 %v1696
  %v1698 = vpop.xlane.xlu0 %1697
  %v1699 = vsel %vm165, %v1645, -inf
  %1700 = vmax.xlane.f32.xlu0 %v1699
  %v1701 = vpop.xlane.xlu0 %1700
  %v1702 = vsel %vm165, %v1648, -inf
  %1703 = vmax.xlane.f32.xlu0 %v1702
  %v1704 = vpop.xlane.xlu0 %1703
  %v1705 = vsel %vm165, %v1653, -inf
  %1706 = vmax.xlane.f32.xlu0 %v1705
  %v1707 = vpop.xlane.xlu0 %1706
  %v1708 = vsel %vm165, %v1656, -inf
  %1709 = vmax.xlane.f32.xlu0 %v1708
  %v1710 = vpop.xlane.xlu0 %1709
  %v1711 = vsel %vm165, %v1661, -inf
  %1712 = vmax.xlane.f32.xlu0 %v1711
  %v1713 = vpop.xlane.xlu0 %1712
  %v1714 = vsel %vm165, %v1664, -inf
  %1715 = vmax.xlane.f32.xlu0 %v1714
  %v1716 = vpop.xlane.xlu0 %1715
  %v1717 = vsel %vm165, %v1669, -inf
  %1718 = vmax.xlane.f32.xlu0 %v1717
  %v1719 = vpop.xlane.xlu0 %1718
  %v1720 = vsel %vm165, %v1672, -inf
  %1721 = vmax.xlane.f32.xlu0 %v1720
  %v1722 = vpop.xlane.xlu0 %1721
  %v1723 = vsub.f32 %v1556, %v1677
  %v1724 = vsub.f32 %v1559, %v1680
  %v1725 = vsub.f32 %v1564, %v1683
  %v1726 = vsub.f32 %v1567, %v1686
  %v1727 = vsub.f32 %v1572, %v1689
  %v1728 = vsub.f32 %v1575, %v1692
  %v1729 = vsub.f32 %v1580, %v1695
  %v1730 = vsub.f32 %v1583, %v1698
  %v1731 = vsub.f32 %v1645, %v1701
  %v1732 = vsub.f32 %v1648, %v1704
  %v1733 = vsub.f32 %v1653, %v1707
  %v1734 = vsub.f32 %v1656, %v1710
  %v1735 = vsub.f32 %v1661, %v1713
  %v1736 = vsub.f32 %v1664, %v1716
  %v1737 = vsub.f32 %v1669, %v1719
  %v1738 = vsub.f32 %v1672, %v1722
  %v1739 = vmul.f32 %v1723, 1.442695
  %v1740 = vpow.pop %v1739
  %v1741 = vmul.f32 %v1724, 1.442695
  %v1742 = vpow.pop %v1741
  %v1743 = vmul.f32 %v1725, 1.442695
  %v1744 = vpow.pop %v1743
  %v1745 = vmul.f32 %v1726, 1.442695
  %v1746 = vpow.pop %v1745
  %v1747 = vmul.f32 %v1727, 1.442695
  %v1748 = vpow.pop %v1747
  %v1749 = vmul.f32 %v1728, 1.442695
  %v1750 = vpow.pop %v1749
  %v1751 = vmul.f32 %v1729, 1.442695
  %v1752 = vpow.pop %v1751
  %v1753 = vmul.f32 %v1730, 1.442695
  %v1754 = vpow.pop %v1753
  %v1755 = vmul.f32 %v1731, 1.442695
  %v1756 = vpow.pop %v1755
  %v1757 = vmul.f32 %v1732, 1.442695
  %v1758 = vpow.pop %v1757
  %v1759 = vmul.f32 %v1733, 1.442695
  %v1760 = vpow.pop %v1759
  %v1761 = vmul.f32 %v1734, 1.442695
  %v1762 = vpow.pop %v1761
  %v1763 = vmul.f32 %v1735, 1.442695
  %v1764 = vpow.pop %v1763
  %v1765 = vmul.f32 %v1736, 1.442695
  %v1766 = vpow.pop %v1765
  %v1767 = vmul.f32 %v1737, 1.442695
  %v1768 = vpow.pop %v1767
  %v1769 = vmul.f32 %v1738, 1.442695
  %v1770 = vpow.pop %v1769
  %v1771 = vsel %vm165, %v1740, 0.0
  %1772 = vadd.xlane.f32.xlu0 %v1771
  %v1773 = vpop.xlane.xlu0 %1772
  %v1774 = vsel %vm165, %v1742, 0.0
  %1775 = vadd.xlane.f32.xlu0 %v1774
  %v1776 = vpop.xlane.xlu0 %1775
  %v1777 = vsel %vm165, %v1744, 0.0
  %1778 = vadd.xlane.f32.xlu0 %v1777
  %v1779 = vpop.xlane.xlu0 %1778
  %v1780 = vsel %vm165, %v1746, 0.0
  %1781 = vadd.xlane.f32.xlu0 %v1780
  %v1782 = vpop.xlane.xlu0 %1781
  %v1783 = vsel %vm165, %v1748, 0.0
  %1784 = vadd.xlane.f32.xlu0 %v1783
  %v1785 = vpop.xlane.xlu0 %1784
  %v1786 = vsel %vm165, %v1750, 0.0
  %1787 = vadd.xlane.f32.xlu0 %v1786
  %v1788 = vpop.xlane.xlu0 %1787
  %v1789 = vsel %vm165, %v1752, 0.0
  %1790 = vadd.xlane.f32.xlu0 %v1789
  %v1791 = vpop.xlane.xlu0 %1790
  %v1792 = vsel %vm165, %v1754, 0.0
  %1793 = vadd.xlane.f32.xlu0 %v1792
  %v1794 = vpop.xlane.xlu0 %1793
  %v1795 = vsel %vm165, %v1756, 0.0
  %1796 = vadd.xlane.f32.xlu0 %v1795
  %v1797 = vpop.xlane.xlu0 %1796
  %v1798 = vsel %vm165, %v1758, 0.0
  %1799 = vadd.xlane.f32.xlu0 %v1798
  %v1800 = vpop.xlane.xlu0 %1799
  %v1801 = vsel %vm165, %v1760, 0.0
  %1802 = vadd.xlane.f32.xlu0 %v1801
  %v1803 = vpop.xlane.xlu0 %1802
  %v1804 = vsel %vm165, %v1762, 0.0
  %1805 = vadd.xlane.f32.xlu0 %v1804
  %v1806 = vpop.xlane.xlu0 %1805
  %v1807 = vsel %vm165, %v1764, 0.0
  %1808 = vadd.xlane.f32.xlu0 %v1807
  %v1809 = vpop.xlane.xlu0 %1808
  %v1810 = vsel %vm165, %v1766, 0.0
  %1811 = vadd.xlane.f32.xlu0 %v1810
  %v1812 = vpop.xlane.xlu0 %1811
  %v1813 = vsel %vm165, %v1768, 0.0
  %1814 = vadd.xlane.f32.xlu0 %v1813
  %v1815 = vpop.xlane.xlu0 %1814
  %v1816 = vsel %vm165, %v1770, 0.0
  %1817 = vadd.xlane.f32.xlu0 %v1816
  %v1818 = vpop.xlane.xlu0 %1817
  %v1819 = vrcp.pop %v1773
  %v1820 = vrcp.pop %v1776
  %v1821 = vrcp.pop %v1779
  %v1822 = vrcp.pop %v1782
  %v1823 = vrcp.pop %v1785
  %v1824 = vrcp.pop %v1788
  %v1825 = vrcp.pop %v1791
  %v1826 = vrcp.pop %v1794
  %v1827 = vrcp.pop %v1797
  %v1828 = vrcp.pop %v1800
  %v1829 = vrcp.pop %v1803
  %v1830 = vrcp.pop %v1806
  %v1831 = vrcp.pop %v1809
  %v1832 = vrcp.pop %v1812
  %v1833 = vrcp.pop %v1815
  %v1834 = vrcp.pop %v1818
  %v1835 = vmul.f32 %v1740, %v1819
  %v1836 = vmul.f32 %v1742, %v1820
  %v1837 = vmul.f32 %v1744, %v1821
  %v1838 = vmul.f32 %v1746, %v1822
  %v1839 = vmul.f32 %v1748, %v1823
  %v1840 = vmul.f32 %v1750, %v1824
  %v1841 = vmul.f32 %v1752, %v1825
  %v1842 = vmul.f32 %v1754, %v1826
  %v1843 = vmul.f32 %v1756, %v1827
  %v1844 = vmul.f32 %v1758, %v1828
  %v1845 = vmul.f32 %v1760, %v1829
  %v1846 = vmul.f32 %v1762, %v1830
  %v1847 = vmul.f32 %v1764, %v1831
  %v1848 = vmul.f32 %v1766, %v1832
  %v1849 = vmul.f32 %v1768, %v1833
  %v1850 = vmul.f32 %v1770, %v1834
  %v1851 = vpack.c.bf16 %v1836, %v1835
  %v1852 = vpack.c.bf16 %v1838, %v1837
  %v1853 = vpack.c.bf16 %v1840, %v1839
  %v1854 = vpack.c.bf16 %v1842, %v1841
  %v1855 = vpack.c.bf16 %v1844, %v1843
  %v1856 = vpack.c.bf16 %v1846, %v1845
  %v1857 = vpack.c.bf16 %v1848, %v1847
  %v1858 = vpack.c.bf16 %v1850, %v1849
  %v1860 = vsel %vm165, %v1851, 0
  %v1863 = vsel %vm165, %v1852, 0
  %v1866 = vsel %vm165, %v1853, 0
  %v1869 = vsel %vm165, %v1854, 0
  %1871 = vmatprep.subr.bf16.mxu0 0
  %1872 = vmatpush1.bf16.msra.mxu0 0
  %1873 = vmatprep.subr.bf16.mxu0 0
  %1874 = vmatpush1.bf16.msra.mxu0 0
  %1875 = vmatprep.subr.bf16.mxu0 0
  %1876 = vmatpush1.bf16.msra.mxu0 0
  %1877 = vmatprep.subr.bf16.mxu0 0
  %1878 = vmatpush1.bf16.msra.mxu0 0
  %1879 = vmatprep.subr.bf16.mxu0 0
  %1880 = vmatpush1.bf16.msra.mxu0 %v1492
  %1881 = vmatprep.subr.bf16.mxu0 0
  %1882 = vmatpush1.bf16.msra.mxu0 %v1491
  %1883 = vmatprep.subr.bf16.mxu0 0
  %1884 = vmatpush1.bf16.msra.mxu0 %v1490
  %1885 = vmatprep.subr.bf16.mxu0 0
  %1886 = vmatpush1.bf16.msra.mxu0 %v1489
  %1887 = vmatprep.subr.bf16.mxu0 0
  %1888 = vmatpush2.bf16.msra.mxu0 0
  %1889 = vmatprep.subr.bf16.mxu0 0
  %1890 = vmatpush2.bf16.msra.mxu0 0
  %1891 = vmatprep.subr.bf16.mxu0 0
  %1892 = vmatpush2.bf16.msra.mxu0 0
  %1893 = vmatprep.subr.bf16.mxu0 0
  %1894 = vmatpush2.bf16.msra.mxu0 0
  %1895 = vmatprep.subr.bf16.mxu0 0
  %1896 = vmatpush2.bf16.msra.mxu0 0
  %1897 = vmatprep.subr.bf16.mxu0 0
  %1898 = vmatpush2.bf16.msra.mxu0 0
  %1899 = vmatprep.subr.bf16.mxu0 0
  %1900 = vmatpush2.bf16.msra.mxu0 0
  %1901 = vmatprep.subr.bf16.mxu0 0
  %1902 = vmatpush2.bf16.msra.mxu0 0
  %1903 = vmatprep.mubr.bf16.mxu0 0
  %1904 = vmatmul.mubr.bf16.gmra.mxu0 %v1860
  %v1905 = vpop.f32.mrf.mxu0
  %v1906 = vadd.f32 0.0, %v1905
  %v1907 = vpop.f32.mrf.mxu0
  %v1908 = vpop.f32.mrf.mxu0
  %v1909 = vadd.f32 0.0, %v1908
  %v1910 = vpop.f32.mrf.mxu0
  %1911 = vmatprep.mubr.bf16.mxu0 0
  %1912 = vmatmul.mubr.bf16.gmra.mxu0 %v1863
  %v1913 = vpop.f32.mrf.mxu0
  %v1914 = vadd.f32 0.0, %v1913
  %v1915 = vpop.f32.mrf.mxu0
  %v1916 = vpop.f32.mrf.mxu0
  %v1917 = vadd.f32 0.0, %v1916
  %v1918 = vpop.f32.mrf.mxu0
  %1919 = vmatprep.mubr.bf16.mxu0 0
  %1920 = vmatmul.mubr.bf16.gmra.mxu0 %v1866
  %v1921 = vpop.f32.mrf.mxu0
  %v1922 = vadd.f32 0.0, %v1921
  %v1923 = vpop.f32.mrf.mxu0
  %v1924 = vpop.f32.mrf.mxu0
  %v1925 = vadd.f32 0.0, %v1924
  %v1926 = vpop.f32.mrf.mxu0
  %1927 = vmatprep.mubr.bf16.mxu0 0
  %1928 = vmatmul.mubr.bf16.gmra.mxu0 %v1869
  %v1929 = vpop.f32.mrf.mxu0
  %v1930 = vadd.f32 0.0, %v1929
  %v1931 = vpop.f32.mrf.mxu0
  %v1932 = vpop.f32.mrf.mxu0
  %v1933 = vadd.f32 0.0, %v1932
  %v1934 = vpop.f32.mrf.mxu0
  %1935 = vdwg.mxu0
  %v1937 = vsel %vm165, %v1855, 0
  %v1940 = vsel %vm165, %v1856, 0
  %v1943 = vsel %vm165, %v1857, 0
  %v1946 = vsel %vm165, %v1858, 0
  %1948 = vmatprep.subr.bf16.mxu0 0
  %1949 = vmatpush1.bf16.msra.mxu0 0
  %1950 = vmatprep.subr.bf16.mxu0 0
  %1951 = vmatpush1.bf16.msra.mxu0 0
  %1952 = vmatprep.subr.bf16.mxu0 0
  %1953 = vmatpush1.bf16.msra.mxu0 0
  %1954 = vmatprep.subr.bf16.mxu0 0
  %1955 = vmatpush1.bf16.msra.mxu0 0
  %1956 = vmatprep.subr.bf16.mxu0 0
  %1957 = vmatpush1.bf16.msra.mxu0 %v1496
  %1958 = vmatprep.subr.bf16.mxu0 0
  %1959 = vmatpush1.bf16.msra.mxu0 %v1495
  %1960 = vmatprep.subr.bf16.mxu0 0
  %1961 = vmatpush1.bf16.msra.mxu0 %v1494
  %1962 = vmatprep.subr.bf16.mxu0 0
  %1963 = vmatpush1.bf16.msra.mxu0 %v1493
  %1964 = vmatprep.subr.bf16.mxu0 0
  %1965 = vmatpush2.bf16.msra.mxu0 0
  %1966 = vmatprep.subr.bf16.mxu0 0
  %1967 = vmatpush2.bf16.msra.mxu0 0
  %1968 = vmatprep.subr.bf16.mxu0 0
  %1969 = vmatpush2.bf16.msra.mxu0 0
  %1970 = vmatprep.subr.bf16.mxu0 0
  %1971 = vmatpush2.bf16.msra.mxu0 0
  %1972 = vmatprep.subr.bf16.mxu0 0
  %1973 = vmatpush2.bf16.msra.mxu0 0
  %1974 = vmatprep.subr.bf16.mxu0 0
  %1975 = vmatpush2.bf16.msra.mxu0 0
  %1976 = vmatprep.subr.bf16.mxu0 0
  %1977 = vmatpush2.bf16.msra.mxu0 0
  %1978 = vmatprep.subr.bf16.mxu0 0
  %1979 = vmatpush2.bf16.msra.mxu0 0
  %1980 = vmatprep.mubr.bf16.mxu0 0
  %1981 = vmatmul.mubr.bf16.gmra.mxu0 %v1937
  %v1982 = vpop.f32.mrf.mxu0
  %v1983 = vadd.f32 0.0, %v1982
  %v1984 = vpop.f32.mrf.mxu0
  %v1985 = vpop.f32.mrf.mxu0
  %v1986 = vadd.f32 0.0, %v1985
  %v1987 = vpop.f32.mrf.mxu0
  %1988 = vmatprep.mubr.bf16.mxu0 0
  %1989 = vmatmul.mubr.bf16.gmra.mxu0 %v1940
  %v1990 = vpop.f32.mrf.mxu0
  %v1991 = vadd.f32 0.0, %v1990
  %v1992 = vpop.f32.mrf.mxu0
  %v1993 = vpop.f32.mrf.mxu0
  %v1994 = vadd.f32 0.0, %v1993
  %v1995 = vpop.f32.mrf.mxu0
  %1996 = vmatprep.mubr.bf16.mxu0 0
  %1997 = vmatmul.mubr.bf16.gmra.mxu0 %v1943
  %v1998 = vpop.f32.mrf.mxu0
  %v1999 = vadd.f32 0.0, %v1998
  %v2000 = vpop.f32.mrf.mxu0
  %v2001 = vpop.f32.mrf.mxu0
  %v2002 = vadd.f32 0.0, %v2001
  %v2003 = vpop.f32.mrf.mxu0
  %2004 = vmatprep.mubr.bf16.mxu0 0
  %2005 = vmatmul.mubr.bf16.gmra.mxu0 %v1946
  %v2006 = vpop.f32.mrf.mxu0
  %v2007 = vadd.f32 0.0, %v2006
  %v2008 = vpop.f32.mrf.mxu0
  %v2009 = vpop.f32.mrf.mxu0
  %v2010 = vadd.f32 0.0, %v2009
  %v2011 = vpop.f32.mrf.mxu0
  %2012 = vdwg.mxu0
  %v2013 = vpack.c.bf16 %v1909, %v1906
  %v2014 = vpack.c.bf16 %v1917, %v1914
  %v2015 = vpack.c.bf16 %v1925, %v1922
  %v2016 = vpack.c.bf16 %v1933, %v1930
  %v2017 = vpack.c.bf16 %v1986, %v1983
  %v2018 = vpack.c.bf16 %v1994, %v1991
  %v2019 = vpack.c.bf16 %v2002, %v1999
  %v2020 = vpack.c.bf16 %v2010, %v2007
  %v2025 = vunpack.c.l.b16 %v1106
  %v2026 = vunpack.c.l.b16 %v1107
  %v2027 = vunpack.c.l.b16 %v1108
  %v2028 = vunpack.c.l.b16 %v1109
  %v2029 = vpack.c.b16 %v2026, %v2025
  %v2030 = vpack.c.b16 %v2028, %v2027
  %v2034 = vsel %vm553, %v2013, 0
  %v2037 = vsel %vm553, %v2014, 0
  %v2040 = vsel %vm553, %v2015, 0
  %v2043 = vsel %vm553, %v2016, 0
  %v2046 = vsel %vm553, %v2017, 0
  %v2049 = vsel %vm553, %v2018, 0
  %v2052 = vsel %vm553, %v2019, 0
  %v2055 = vsel %vm553, %v2020, 0
  %2057 = vmatprep.subr.bf16.mxu0 0
  %2058 = vmatpush1.bf16.msra.mxu0 0
  %2059 = vmatprep.subr.bf16.mxu0 0
  %2060 = vmatpush1.bf16.msra.mxu0 0
  %2061 = vmatprep.subr.bf16.mxu0 0
  %2062 = vmatpush1.bf16.msra.mxu0 0
  %2063 = vmatprep.subr.bf16.mxu0 0
  %2064 = vmatpush1.bf16.msra.mxu0 0
  %2065 = vmatprep.subr.bf16.mxu0 0
  %2066 = vmatpush1.bf16.msra.mxu0 0
  %2067 = vmatprep.subr.bf16.mxu0 0
  %2068 = vmatpush1.bf16.msra.mxu0 0
  %2069 = vmatprep.subr.bf16.mxu0 0
  %2070 = vmatpush1.bf16.msra.mxu0 %v2030
  %2071 = vmatprep.subr.bf16.mxu0 0
  %2072 = vmatpush1.bf16.msra.mxu0 %v2029
  %2073 = vmatprep.subr.bf16.mxu0 0
  %2074 = vmatpush2.bf16.msra.mxu0 0
  %2075 = vmatprep.subr.bf16.mxu0 0
  %2076 = vmatpush2.bf16.msra.mxu0 0
  %2077 = vmatprep.subr.bf16.mxu0 0
  %2078 = vmatpush2.bf16.msra.mxu0 0
  %2079 = vmatprep.subr.bf16.mxu0 0
  %2080 = vmatpush2.bf16.msra.mxu0 0
  %2081 = vmatprep.subr.bf16.mxu0 0
  %2082 = vmatpush2.bf16.msra.mxu0 0
  %2083 = vmatprep.subr.bf16.mxu0 0
  %2084 = vmatpush2.bf16.msra.mxu0 0
  %2085 = vmatprep.subr.bf16.mxu0 0
  %2086 = vmatpush2.bf16.msra.mxu0 0
  %2087 = vmatprep.subr.bf16.mxu0 0
  %2088 = vmatpush2.bf16.msra.mxu0 0
  %2089 = vmatprep.mubr.bf16.mxu0 0
  %2090 = vmatmul.mubr.bf16.gmra.mxu0 %v2034
  %v2091 = vpop.f32.mrf.mxu0
  %v2092 = vadd.f32 0.0, %v2091
  %v2093 = vpop.f32.mrf.mxu0
  %v2094 = vpop.f32.mrf.mxu0
  %v2095 = vadd.f32 0.0, %v2094
  %v2096 = vpop.f32.mrf.mxu0
  %2097 = vmatprep.mubr.bf16.mxu0 0
  %2098 = vmatmul.mubr.bf16.gmra.mxu0 %v2037
  %v2099 = vpop.f32.mrf.mxu0
  %v2100 = vadd.f32 0.0, %v2099
  %v2101 = vpop.f32.mrf.mxu0
  %v2102 = vpop.f32.mrf.mxu0
  %v2103 = vadd.f32 0.0, %v2102
  %v2104 = vpop.f32.mrf.mxu0
  %2105 = vmatprep.mubr.bf16.mxu0 0
  %2106 = vmatmul.mubr.bf16.gmra.mxu0 %v2040
  %v2107 = vpop.f32.mrf.mxu0
  %v2108 = vadd.f32 0.0, %v2107
  %v2109 = vpop.f32.mrf.mxu0
  %v2110 = vpop.f32.mrf.mxu0
  %v2111 = vadd.f32 0.0, %v2110
  %v2112 = vpop.f32.mrf.mxu0
  %2113 = vmatprep.mubr.bf16.mxu0 0
  %2114 = vmatmul.mubr.bf16.gmra.mxu0 %v2043
  %v2115 = vpop.f32.mrf.mxu0
  %v2116 = vadd.f32 0.0, %v2115
  %v2117 = vpop.f32.mrf.mxu0
  %v2118 = vpop.f32.mrf.mxu0
  %v2119 = vadd.f32 0.0, %v2118
  %v2120 = vpop.f32.mrf.mxu0
  %2121 = vmatprep.mubr.bf16.mxu0 0
  %2122 = vmatmul.mubr.bf16.gmra.mxu0 %v2046
  %v2123 = vpop.f32.mrf.mxu0
  %v2124 = vadd.f32 0.0, %v2123
  %v2125 = vpop.f32.mrf.mxu0
  %v2126 = vpop.f32.mrf.mxu0
  %v2127 = vadd.f32 0.0, %v2126
  %v2128 = vpop.f32.mrf.mxu0
  %2129 = vmatprep.mubr.bf16.mxu0 0
  %2130 = vmatmul.mubr.bf16.gmra.mxu0 %v2049
  %v2131 = vpop.f32.mrf.mxu0
  %v2132 = vadd.f32 0.0, %v2131
  %v2133 = vpop.f32.mrf.mxu0
  %v2134 = vpop.f32.mrf.mxu0
  %v2135 = vadd.f32 0.0, %v2134
  %v2136 = vpop.f32.mrf.mxu0
  %2137 = vmatprep.mubr.bf16.mxu0 0
  %2138 = vmatmul.mubr.bf16.gmra.mxu0 %v2052
  %v2139 = vpop.f32.mrf.mxu0
  %v2140 = vadd.f32 0.0, %v2139
  %v2141 = vpop.f32.mrf.mxu0
  %v2142 = vpop.f32.mrf.mxu0
  %v2143 = vadd.f32 0.0, %v2142
  %v2144 = vpop.f32.mrf.mxu0
  %2145 = vmatprep.mubr.bf16.mxu0 0
  %2146 = vmatmul.mubr.bf16.gmra.mxu0 %v2055
  %v2147 = vpop.f32.mrf.mxu0
  %v2148 = vadd.f32 0.0, %v2147
  %v2149 = vpop.f32.mrf.mxu0
  %v2150 = vpop.f32.mrf.mxu0
  %v2151 = vadd.f32 0.0, %v2150
  %v2152 = vpop.f32.mrf.mxu0
  %2153 = vdwg.mxu0
  %v2158 = vunpack.c.l.b16 %v137
  %v2159 = vunpack.c.l.b16 %v138
  %v2160 = vunpack.c.l.b16 %v139
  %v2161 = vunpack.c.l.b16 %v140
  %v2162 = vpack.c.b16 %v2159, %v2158
  %v2163 = vpack.c.b16 %v2161, %v2160
  %v2167 = vsel %vm553, %v1070, 0
  %v2170 = vsel %vm553, %v1071, 0
  %v2173 = vsel %vm553, %v1072, 0
  %v2176 = vsel %vm553, %v1073, 0
  %v2179 = vsel %vm553, %v1074, 0
  %v2182 = vsel %vm553, %v1075, 0
  %v2185 = vsel %vm553, %v1076, 0
  %v2188 = vsel %vm553, %v1077, 0
  %2190 = vmatprep.subr.bf16.mxu0 0
  %2191 = vmatpush1.bf16.msra.mxu0 0
  %2192 = vmatprep.subr.bf16.mxu0 0
  %2193 = vmatpush1.bf16.msra.mxu0 0
  %2194 = vmatprep.subr.bf16.mxu0 0
  %2195 = vmatpush1.bf16.msra.mxu0 0
  %2196 = vmatprep.subr.bf16.mxu0 0
  %2197 = vmatpush1.bf16.msra.mxu0 0
  %2198 = vmatprep.subr.bf16.mxu0 0
  %2199 = vmatpush1.bf16.msra.mxu0 0
  %2200 = vmatprep.subr.bf16.mxu0 0
  %2201 = vmatpush1.bf16.msra.mxu0 0
  %2202 = vmatprep.subr.bf16.mxu0 0
  %2203 = vmatpush1.bf16.msra.mxu0 %v2163
  %2204 = vmatprep.subr.bf16.mxu0 0
  %2205 = vmatpush1.bf16.msra.mxu0 %v2162
  %2206 = vmatprep.subr.bf16.mxu0 0
  %2207 = vmatpush2.bf16.msra.mxu0 0
  %2208 = vmatprep.subr.bf16.mxu0 0
  %2209 = vmatpush2.bf16.msra.mxu0 0
  %2210 = vmatprep.subr.bf16.mxu0 0
  %2211 = vmatpush2.bf16.msra.mxu0 0
  %2212 = vmatprep.subr.bf16.mxu0 0
  %2213 = vmatpush2.bf16.msra.mxu0 0
  %2214 = vmatprep.subr.bf16.mxu0 0
  %2215 = vmatpush2.bf16.msra.mxu0 0
  %2216 = vmatprep.subr.bf16.mxu0 0
  %2217 = vmatpush2.bf16.msra.mxu0 0
  %2218 = vmatprep.subr.bf16.mxu0 0
  %2219 = vmatpush2.bf16.msra.mxu0 0
  %2220 = vmatprep.subr.bf16.mxu0 0
  %2221 = vmatpush2.bf16.msra.mxu0 0
  %2222 = vmatprep.mubr.bf16.mxu0 0
  %2223 = vmatmul.mubr.bf16.gmra.mxu0 %v2167
  %v2224 = vpop.f32.mrf.mxu0
  %v2225 = vadd.f32 %v2092, %v2224
  %v2226 = vpop.f32.mrf.mxu0
  %v2227 = vpop.f32.mrf.mxu0
  %v2228 = vadd.f32 %v2095, %v2227
  %v2229 = vpop.f32.mrf.mxu0
  %2230 = vmatprep.mubr.bf16.mxu0 0
  %2231 = vmatmul.mubr.bf16.gmra.mxu0 %v2170
  %v2232 = vpop.f32.mrf.mxu0
  %v2233 = vadd.f32 %v2100, %v2232
  %v2234 = vpop.f32.mrf.mxu0
  %v2235 = vpop.f32.mrf.mxu0
  %v2236 = vadd.f32 %v2103, %v2235
  %v2237 = vpop.f32.mrf.mxu0
  %2238 = vmatprep.mubr.bf16.mxu0 0
  %2239 = vmatmul.mubr.bf16.gmra.mxu0 %v2173
  %v2240 = vpop.f32.mrf.mxu0
  %v2241 = vadd.f32 %v2108, %v2240
  %v2242 = vpop.f32.mrf.mxu0
  %v2243 = vpop.f32.mrf.mxu0
  %v2244 = vadd.f32 %v2111, %v2243
  %v2245 = vpop.f32.mrf.mxu0
  %2246 = vmatprep.mubr.bf16.mxu0 0
  %2247 = vmatmul.mubr.bf16.gmra.mxu0 %v2176
  %v2248 = vpop.f32.mrf.mxu0
  %v2249 = vadd.f32 %v2116, %v2248
  %v2250 = vpop.f32.mrf.mxu0
  %v2251 = vpop.f32.mrf.mxu0
  %v2252 = vadd.f32 %v2119, %v2251
  %v2253 = vpop.f32.mrf.mxu0
  %2254 = vmatprep.mubr.bf16.mxu0 0
  %2255 = vmatmul.mubr.bf16.gmra.mxu0 %v2179
  %v2256 = vpop.f32.mrf.mxu0
  %v2257 = vadd.f32 %v2124, %v2256
  %v2258 = vpop.f32.mrf.mxu0
  %v2259 = vpop.f32.mrf.mxu0
  %v2260 = vadd.f32 %v2127, %v2259
  %v2261 = vpop.f32.mrf.mxu0
  %2262 = vmatprep.mubr.bf16.mxu0 0
  %2263 = vmatmul.mubr.bf16.gmra.mxu0 %v2182
  %v2264 = vpop.f32.mrf.mxu0
  %v2265 = vadd.f32 %v2132, %v2264
  %v2266 = vpop.f32.mrf.mxu0
  %v2267 = vpop.f32.mrf.mxu0
  %v2268 = vadd.f32 %v2135, %v2267
  %v2269 = vpop.f32.mrf.mxu0
  %2270 = vmatprep.mubr.bf16.mxu0 0
  %2271 = vmatmul.mubr.bf16.gmra.mxu0 %v2185
  %v2272 = vpop.f32.mrf.mxu0
  %v2273 = vadd.f32 %v2140, %v2272
  %v2274 = vpop.f32.mrf.mxu0
  %v2275 = vpop.f32.mrf.mxu0
  %v2276 = vadd.f32 %v2143, %v2275
  %v2277 = vpop.f32.mrf.mxu0
  %2278 = vmatprep.mubr.bf16.mxu0 0
  %2279 = vmatmul.mubr.bf16.gmra.mxu0 %v2188
  %v2280 = vpop.f32.mrf.mxu0
  %v2281 = vadd.f32 %v2148, %v2280
  %v2282 = vpop.f32.mrf.mxu0
  %v2283 = vpop.f32.mrf.mxu0
  %v2284 = vadd.f32 %v2151, %v2283
  %v2285 = vpop.f32.mrf.mxu0
  %2286 = vdwg.mxu0
  %v2287 = vld [vmem:[%s5] sm:$0x1]
  %v2289 = vlaneseq
  %v2290 = vshrl.u32 %v2289, 7
  %v2291 = vsub.s32 0, %v2290
  %v2292 = vrot.slane %v2287, %v2291
  %v2294 = vadd.f32 %v2225, %v2292
  %v2295 = vadd.f32 %v2228, %v2292
  %v2296 = vadd.f32 %v2233, %v2292
  %v2297 = vadd.f32 %v2236, %v2292
  %v2298 = vadd.f32 %v2241, %v2292
  %v2299 = vadd.f32 %v2244, %v2292
  %v2300 = vadd.f32 %v2249, %v2292
  %v2301 = vadd.f32 %v2252, %v2292
  %v2302 = vadd.f32 %v2257, %v2292
  %v2303 = vadd.f32 %v2260, %v2292
  %v2304 = vadd.f32 %v2265, %v2292
  %v2305 = vadd.f32 %v2268, %v2292
  %v2306 = vadd.f32 %v2273, %v2292
  %v2307 = vadd.f32 %v2276, %v2292
  %v2308 = vadd.f32 %v2281, %v2292
  %v2309 = vadd.f32 %v2284, %v2292
  %2310 = vxpose.xlu0.b32.start [1/16] %v2294, 128
  %2311 = vxpose.xlu0.b32.cont [2/16] %v2295, 128
  %2312 = vxpose.xlu0.b32.cont [3/16] %v2296, 128
  %2313 = vxpose.xlu0.b32.cont [4/16] %v2297, 128
  %2314 = vxpose.xlu0.b32.cont [5/16] %v2298, 128
  %2315 = vxpose.xlu0.b32.cont [6/16] %v2299, 128
  %2316 = vxpose.xlu0.b32.cont [7/16] %v2300, 128
  %2317 = vxpose.xlu0.b32.cont [8/16] %v2301, 128
  %2318 = vxpose.xlu0.b32.cont [9/16] 0.0, 128
  %2319 = vxpose.xlu0.b32.cont [10/16] 0.0, 128
  %2320 = vxpose.xlu0.b32.cont [11/16] 0.0, 128
  %2321 = vxpose.xlu0.b32.cont [12/16] 0.0, 128
  %2322 = vxpose.xlu0.b32.cont [13/16] 0.0, 128
  %2323 = vxpose.xlu0.b32.cont [14/16] 0.0, 128
  %2324 = vxpose.xlu0.b32.cont [15/16] 0.0, 128
  %2325 = vxpose.xlu0.b32.end [16/16] 0.0, 128
  %v2326 = vpop.trf.xlu0
  %v2327 = vpop.trf.xlu0
  %v2328 = vpop.trf.xlu0
  %v2329 = vpop.trf.xlu0
  %v2330 = vpop.trf.xlu0
  %v2331 = vpop.trf.xlu0
  %v2332 = vpop.trf.xlu0
  %v2333 = vpop.trf.xlu0
  %v2334 = vpop.trf.xlu0
  %v2335 = vpop.trf.xlu0
  %v2336 = vpop.trf.xlu0
  %v2337 = vpop.trf.xlu0
  %v2338 = vpop.trf.xlu0
  %v2339 = vpop.trf.xlu0
  %v2340 = vpop.trf.xlu0
  %v2341 = vpop.trf.xlu0
  %2342 = vst.msk [vmem:[%s6] sm:$0xff] %vm165, %v2326
  %2343 = vst.msk [vmem:[%s6 + $0x8] sm:$0xff] %vm165, %v2327
  %2344 = vst.msk [vmem:[%s6 + $0x10] sm:$0xff] %vm165, %v2328
  %2345 = vst.msk [vmem:[%s6 + $0x18] sm:$0xff] %vm165, %v2329
  %2346 = vst.msk [vmem:[%s6 + $0x20] sm:$0xff] %vm165, %v2330
  %2347 = vst.msk [vmem:[%s6 + $0x28] sm:$0xff] %vm165, %v2331
  %2348 = vst.msk [vmem:[%s6 + $0x30] sm:$0xff] %vm165, %v2332
  %2349 = vst.msk [vmem:[%s6 + $0x38] sm:$0xff] %vm165, %v2333
  %2350 = vxpose.xlu0.b32.start [1/16] %v2302, 128
  %2351 = vxpose.xlu0.b32.cont [2/16] %v2303, 128
  %2352 = vxpose.xlu0.b32.cont [3/16] %v2304, 128
  %2353 = vxpose.xlu0.b32.cont [4/16] %v2305, 128
  %2354 = vxpose.xlu0.b32.cont [5/16] %v2306, 128
  %2355 = vxpose.xlu0.b32.cont [6/16] %v2307, 128
  %2356 = vxpose.xlu0.b32.cont [7/16] %v2308, 128
  %2357 = vxpose.xlu0.b32.cont [8/16] %v2309, 128
  %2358 = vxpose.xlu0.b32.cont [9/16] 0.0, 128
  %2359 = vxpose.xlu0.b32.cont [10/16] 0.0, 128
  %2360 = vxpose.xlu0.b32.cont [11/16] 0.0, 128
  %2361 = vxpose.xlu0.b32.cont [12/16] 0.0, 128
  %2362 = vxpose.xlu0.b32.cont [13/16] 0.0, 128
  %2363 = vxpose.xlu0.b32.cont [14/16] 0.0, 128
  %2364 = vxpose.xlu0.b32.cont [15/16] 0.0, 128
  %2365 = vxpose.xlu0.b32.end [16/16] 0.0, 128
  %v2366 = vpop.trf.xlu0
  %v2367 = vpop.trf.xlu0
  %v2368 = vpop.trf.xlu0
  %v2369 = vpop.trf.xlu0
  %v2370 = vpop.trf.xlu0
  %v2371 = vpop.trf.xlu0
  %v2372 = vpop.trf.xlu0
  %v2373 = vpop.trf.xlu0
  %v2374 = vpop.trf.xlu0
  %v2375 = vpop.trf.xlu0
  %v2376 = vpop.trf.xlu0
  %v2377 = vpop.trf.xlu0
  %v2378 = vpop.trf.xlu0
  %v2379 = vpop.trf.xlu0
  %v2380 = vpop.trf.xlu0
  %v2381 = vpop.trf.xlu0
  %s2382 = scalar_lea.vmem %s6, 64
  %2383 = vst.msk [vmem:[%s2382] sm:$0xff] %vm165, %v2366
  %2384 = vst.msk [vmem:[%s2382 + $0x8] sm:$0xff] %vm165, %v2367
  %2385 = vst.msk [vmem:[%s2382 + $0x10] sm:$0xff] %vm165, %v2368
  %2386 = vst.msk [vmem:[%s2382 + $0x18] sm:$0xff] %vm165, %v2369
  %2387 = vst.msk [vmem:[%s2382 + $0x20] sm:$0xff] %vm165, %v2370
  %2388 = vst.msk [vmem:[%s2382 + $0x28] sm:$0xff] %vm165, %v2371
  %2389 = vst.msk [vmem:[%s2382 + $0x30] sm:$0xff] %vm165, %v2372
  %2390 = vst.msk [vmem:[%s2382 + $0x38] sm:$0xff] %vm165, %v2373
  // Predicated region
  $region26: #{attention_forward.1} parent=0 // pred_check
    _
  $region27: #{attention_forward.1} parent=0 // pred_check_branch
    %2392 = sbr.rel (0) target = $region29
  $region28: #{attention_forward.1} parent=0 // pred_region
    _
  $region29: #{attention_forward.1} parent=0 // pred_fallthru
    _
  // Predicated region
  $region30: #{attention_forward.1} parent=0 // pred_check
    _
  $region31: #{attention_forward.1} parent=0 // pred_check_branch
    %2394 = sbr.rel (0) target = $region33
  $region32: #{attention_forward.1} parent=0 // pred_region
    _
  $region33: #{attention_forward.1} parent=0 // pred_fallthru
    _

</llo_original>
